<compile_context>
chip_gen: v5e
topology: v5e:2x2
jax: 0.10.0
libtpu: 0.0.40
codegen_flags: <defaults>
</compile_context>

<pallas_src>
import math

import numpy as np

import jax
import jax.numpy as jnp
from jax.experimental import pallas as pl
from jax.experimental.pallas import tpu as pltpu

# Make the pure-JAX reference use full-f32 matmuls so the tolerance check is meaningful.
jax.config.update("jax_default_matmul_precision", "highest")

_VMEM_LIMIT_BYTES = 32 * 1024 * 1024  # explicit scoped-VMEM budget (usage here << 1 MiB)


def _cparams():
    return pltpu.CompilerParams(dimension_semantics=("parallel",),
                                vmem_limit_bytes=_VMEM_LIMIT_BYTES)


# -----------------------------------------------------------------------------
# Shared in-kernel helpers
# -----------------------------------------------------------------------------
def _softmax_rows(s):
    """Numerically stable row softmax; reciprocal on the EUP plus one Newton step."""
    s = s - jnp.max(s, axis=-1, keepdims=True)
    p = jnp.exp(s)
    denom = jnp.sum(p, axis=-1, keepdims=True)
    r = pl.reciprocal(denom, approx=True)
    r = r * (2.0 - denom * r)           # Newton refinement -> ~f32-exact reciprocal
    return p * r


def _mha_core(q2d, k2d, v2d, wo, n_heads, scale):
    """Per-head softmax attention + output projection, accumulated lane-dense (Lq, D)."""
    _, D = q2d.shape
    dh = D // n_heads
    out = None
    for h in range(n_heads):
        sl = slice(h * dh, (h + 1) * dh)
        qh, kh, vh = q2d[:, sl], k2d[:, sl], v2d[:, sl]
        s = jax.lax.dot_general(qh, kh, (((1,), (1,)), ((), ())),
                                preferred_element_type=jnp.float32) * scale
        p = _softmax_rows(s)
        ctx_h = jnp.dot(p, vh, preferred_element_type=jnp.float32)          # (Lq, dh)
        contrib = jnp.dot(ctx_h, wo[sl, :], preferred_element_type=jnp.float32)
        out = contrib if out is None else out + contrib
    return out                                                              # (Lq, D)


# -----------------------------------------------------------------------------
# Kernel 1: self-attention + residual + series decomposition 1
# -----------------------------------------------------------------------------
def _make_self_attn_decomp_kernel(n_heads, d_model, scale):
    def kernel(x_ref, wqkv_ref, wo_ref, wma_ref, res_ref, trend_ref):
        x = x_ref[...]                                                       # (L, D)
        qkv = jnp.dot(x, wqkv_ref[...], preferred_element_type=jnp.float32)  # (L, 3D)
        q2d = qkv[:, :d_model]
        k2d = qkv[:, d_model:2 * d_model]
        v2d = qkv[:, 2 * d_model:]
        attn = _mha_core(q2d, k2d, v2d, wo_ref[...], n_heads, scale)
        s = x + attn
        mean = jnp.dot(wma_ref[...], s, preferred_element_type=jnp.float32)
        res_ref[...] = (s - mean).astype(res_ref.dtype)
        trend_ref[...] = mean.astype(trend_ref.dtype)
    return kernel


def self_attn_decomp(x, wqkv, wo, w_ma, *, n_heads):
    B, L, D = x.shape
    scale = 1.0 / math.sqrt(D // n_heads)
    return pl.pallas_call(
        _make_self_attn_decomp_kernel(n_heads, D, scale),
        out_shape=(jax.ShapeDtypeStruct((B, L, D), x.dtype),
                   jax.ShapeDtypeStruct((B, L, D), x.dtype)),
        grid_spec=pltpu.PrefetchScalarGridSpec(
            num_scalar_prefetch=0,
            grid=(B,),
            in_specs=[
                pl.BlockSpec((None, L, D), lambda b: (b, 0, 0)),
                pl.BlockSpec((D, 3 * D), lambda b: (0, 0)),
                pl.BlockSpec((D, D), lambda b: (0, 0)),
                pl.BlockSpec((L, L), lambda b: (0, 0)),
            ],
            out_specs=(pl.BlockSpec((None, L, D), lambda b: (b, 0, 0)),
                       pl.BlockSpec((None, L, D), lambda b: (b, 0, 0))),
        ),
        compiler_params=_cparams(),
    )(x, wqkv, wo, w_ma)


# -----------------------------------------------------------------------------
# Kernel 2: cross-attention + residual + series decomposition 2 (+ trend1 accumulation)
# -----------------------------------------------------------------------------
def _make_cross_attn_decomp_kernel(n_heads, d_model, scale):
    def kernel(x_ref, cross_ref, t1_ref, wq_ref, wkv_ref, wo_ref, wma_ref,
               res_ref, t12_ref):
        x = x_ref[...]                                                       # (L, D)
        cr = cross_ref[...]                                                  # (Lk, D)
        q2d = jnp.dot(x, wq_ref[...], preferred_element_type=jnp.float32)    # (L, D)
        kv = jnp.dot(cr, wkv_ref[...], preferred_element_type=jnp.float32)   # (Lk, 2D)
        k2d = kv[:, :d_model]
        v2d = kv[:, d_model:]
        attn = _mha_core(q2d, k2d, v2d, wo_ref[...], n_heads, scale)
        s = x + attn
        mean = jnp.dot(wma_ref[...], s, preferred_element_type=jnp.float32)
        res_ref[...] = (s - mean).astype(res_ref.dtype)
        t12_ref[...] = (t1_ref[...] + mean).astype(t12_ref.dtype)
    return kernel


def cross_attn_decomp(x, cross, trend1, wq, wkv, wo, w_ma, *, n_heads):
    B, L, D = x.shape
    Lk = cross.shape[1]
    scale = 1.0 / math.sqrt(D // n_heads)
    return pl.pallas_call(
        _make_cross_attn_decomp_kernel(n_heads, D, scale),
        out_shape=(jax.ShapeDtypeStruct((B, L, D), x.dtype),
                   jax.ShapeDtypeStruct((B, L, D), x.dtype)),
        grid_spec=pltpu.PrefetchScalarGridSpec(
            num_scalar_prefetch=0,
            grid=(B,),
            in_specs=[
                pl.BlockSpec((None, L, D), lambda b: (b, 0, 0)),
                pl.BlockSpec((None, Lk, D), lambda b: (b, 0, 0)),
                pl.BlockSpec((None, L, D), lambda b: (b, 0, 0)),
                pl.BlockSpec((D, D), lambda b: (0, 0)),
                pl.BlockSpec((D, 2 * D), lambda b: (0, 0)),
                pl.BlockSpec((D, D), lambda b: (0, 0)),
                pl.BlockSpec((L, L), lambda b: (0, 0)),
            ],
            out_specs=(pl.BlockSpec((None, L, D), lambda b: (b, 0, 0)),
                       pl.BlockSpec((None, L, D), lambda b: (b, 0, 0))),
        ),
        compiler_params=_cparams(),
    )(x, cross, trend1, wq, wkv, wo, w_ma)


# -----------------------------------------------------------------------------
# Kernel 3: FFN (1x1 convs + GELU) + residual + decomp3 + trend sum + circular Conv1d(k=3)
# -----------------------------------------------------------------------------
def _make_ffn_decomp_proj_kernel():
    def kernel(x_ref, t12_ref, wff1_ref, wff2_ref, wma_ref, sp_ref, sm_ref,
               wproj_ref, x3_ref, rt_ref):
        x = x_ref[...]                                                       # (L, D)
        h = jnp.dot(x, wff1_ref[...], preferred_element_type=jnp.float32)    # (L, dff)
        h = jax.nn.gelu(h, approximate=True)
        y = jnp.dot(h, wff2_ref[...], preferred_element_type=jnp.float32)    # (L, D)
        s = x + y
        mean = jnp.dot(wma_ref[...], s, preferred_element_type=jnp.float32)
        x3_ref[...] = (s - mean).astype(x3_ref.dtype)

        trend = t12_ref[...] + mean                                          # (L, D)
        # Circular Conv1d(D -> c_out, k=3, no bias): taps at t-1 / t / t+1.  The
        # circular shifts are folded into tiny (L, L) permutation-matrix matmuls so
        # nothing leaves VMEM.  (pltpu.roll on the sublane axis is the XLU option.)
        tm1 = jnp.dot(sp_ref[...], trend, preferred_element_type=jnp.float32)  # trend[t-1]
        tp1 = jnp.dot(sm_ref[...], trend, preferred_element_type=jnp.float32)  # trend[t+1]
        rt = jnp.dot(tm1, wproj_ref[0], preferred_element_type=jnp.float32)
        rt = rt + jnp.dot(trend, wproj_ref[1], preferred_element_type=jnp.float32)
        rt = rt + jnp.dot(tp1, wproj_ref[2], preferred_element_type=jnp.float32)
        rt_ref[...] = rt.astype(rt_ref.dtype)
    return kernel


def ffn_decomp_proj(x, trend12, w_ff1, w_ff2, w_ma, sp, sm, w_proj_t):
    B, L, D = x.shape
    d_ff = w_ff1.shape[1]
    c_out = w_proj_t.shape[-1]
    return pl.pallas_call(
        _make_ffn_decomp_proj_kernel(),
        out_shape=(jax.ShapeDtypeStruct((B, L, D), x.dtype),
                   jax.ShapeDtypeStruct((B, L, c_out), x.dtype)),
        grid_spec=pltpu.PrefetchScalarGridSpec(
            num_scalar_prefetch=0,
            grid=(B,),
            in_specs=[
                pl.BlockSpec((None, L, D), lambda b: (b, 0, 0)),
                pl.BlockSpec((None, L, D), lambda b: (b, 0, 0)),
                pl.BlockSpec((D, d_ff), lambda b: (0, 0)),
                pl.BlockSpec((d_ff, D), lambda b: (0, 0)),
                pl.BlockSpec((L, L), lambda b: (0, 0)),
                pl.BlockSpec((L, L), lambda b: (0, 0)),
                pl.BlockSpec((L, L), lambda b: (0, 0)),
                pl.BlockSpec((3, D, c_out), lambda b: (0, 0, 0)),
            ],
            out_specs=(pl.BlockSpec((None, L, D), lambda b: (b, 0, 0)),
                       pl.BlockSpec((None, L, c_out), lambda b: (b, 0, 0))),
        ),
        compiler_params=_cparams(),
    )(x, trend12, w_ff1, w_ff2, w_ma, sp, sm, w_proj_t)


# -----------------------------------------------------------------------------
# Host-side constant construction (weights-only work, done once at trace time)
# -----------------------------------------------------------------------------
def build_moving_avg_matrix(L, kernel_size):
    """W such that W @ x == MovingAvg(kernel_size, stride=1)(x) with replicate padding."""
    front = kernel_size - 1 - (kernel_size - 1) // 2
    src = np.clip(np.arange(L + kernel_size - 1) - front, 0, L - 1)
    W = np.zeros((L, L), np.float32)
    for t in range(L):
        for j in range(kernel_size):
            W[t, src[t + j]] += 1.0 / kernel_size
    return jnp.asarray(W)


def build_shift_matrices(L):
    """Circular shift matrices: (Sp @ x)[t] = x[t-1 mod L], (Sm @ x)[t] = x[t+1 mod L]."""
    idx = np.arange(L)
    sp = np.zeros((L, L), np.float32)
    sm = np.zeros((L, L), np.float32)
    sp[idx, (idx - 1) % L] = 1.0
    sm[idx, (idx + 1) % L] = 1.0
    return jnp.asarray(sp), jnp.asarray(sm)


# -----------------------------------------------------------------------------
# DecoderLayer forward (three fused pallas_calls)
# -----------------------------------------------------------------------------
def decoder_layer(x, cross, params, *, n_heads, kernel_size):
    B, L, D = x.shape
    w_ma = build_moving_avg_matrix(L, kernel_size)
    sp, sm = build_shift_matrices(L)

    # One-time weight rearrangements (not per-activation traffic).
    wqkv1 = jnp.concatenate([params["wq1"], params["wk1"], params["wv1"]], axis=1)
    wkv2 = jnp.concatenate([params["wk2"], params["wv2"]], axis=1)
    # torch Conv1d weight (c_out, D, 3) -> (3, D, c_out), tap k=0 is the t-1 tap.
    w_proj_t = jnp.transpose(params["w_proj"], (2, 1, 0))

    x1, trend1 = self_attn_decomp(x, wqkv1, params["wo1"], w_ma, n_heads=n_heads)
    x2, trend12 = cross_attn_decomp(x1, cross, trend1, params["wq2"], wkv2,
                                    params["wo2"], w_ma, n_heads=n_heads)
    x3, residual_trend = ffn_decomp_proj(x2, trend12, params["w_ff1"],
                                         params["w_ff2"], w_ma, sp, sm, w_proj_t)
    return x3, residual_trend


# -----------------------------------------------------------------------------
# Pure-JAX reference (same math, no Pallas) for the correctness check.
# -----------------------------------------------------------------------------
def _moving_avg_ref(x, kernel_size):
    front = kernel_size - 1 - (kernel_size - 1) // 2
    end = (kernel_size - 1) // 2
    xp = jnp.concatenate([jnp.repeat(x[:, :1, :], front, axis=1), x,
                          jnp.repeat(x[:, -1:, :], end, axis=1)], axis=1)
    return jnp.stack([xp[:, t:t + kernel_size, :].mean(axis=1)
                      for t in range(x.shape[1])], axis=1)


def _mha_ref(q_in, kv_in, wq, wk, wv, wo, n_heads):
    B, Lq, D = q_in.shape
    Lk = kv_in.shape[1]
    dh = D // n_heads
    q = (q_in @ wq).reshape(B, Lq, n_heads, dh).transpose(0, 2, 1, 3)
    k = (kv_in @ wk).reshape(B, Lk, n_heads, dh).transpose(0, 2, 1, 3)
    v = (kv_in @ wv).reshape(B, Lk, n_heads, dh).transpose(0, 2, 1, 3)
    s = jnp.einsum("bhqd,bhkd->bhqk", q, k) / math.sqrt(dh)
    p = jax.nn.softmax(s, axis=-1)
    o = jnp.einsum("bhqk,bhkd->bhqd", p, v).transpose(0, 2, 1, 3).reshape(B, Lq, D)
    return o @ wo


def decoder_layer_ref(x, cross, params, *, n_heads, kernel_size):
    B, L, D = x.shape
    s1 = x + _mha_ref(x, x, params["wq1"], params["wk1"], params["wv1"],
                      params["wo1"], n_heads)
    m1 = _moving_avg_ref(s1, kernel_size)
    x1 = s1 - m1
    s2 = x1 + _mha_ref(x1, cross, params["wq2"], params["wk2"], params["wv2"],
                       params["wo2"], n_heads)
    m2 = _moving_avg_ref(s2, kernel_size)
    x2 = s2 - m2
    h = jax.nn.gelu(x2 @ params["w_ff1"], approximate=True)
    y = h @ params["w_ff2"]
    s3 = x2 + y
    m3 = _moving_avg_ref(s3, kernel_size)
    x3 = s3 - m3
    trend = m1 + m2 + m3
    lhs = jnp.concatenate(
        [jnp.roll(trend, 1, axis=1), trend, jnp.roll(trend, -1, axis=1)], axis=-1)
    c_out = params["w_proj"].shape[0]
    w_proj = jnp.transpose(params["w_proj"], (2, 1, 0)).reshape(3 * D, c_out)
    return x3, lhs @ w_proj


# -----------------------------------------------------------------------------
def _init(key, shape, fan_in):
    return (jax.random.normal(key, shape, jnp.float32) / math.sqrt(fan_in))


if __name__ == "__main__":
    B, L, L_cross = 2, 8, 16
    d_model, n_heads, d_ff, c_out, moving_avg = 32, 4, 64, 32, 25

    key = jax.random.PRNGKey(0)
    ks = jax.random.split(key, 14)
    x = jax.random.normal(ks[0], (B, L, d_model), jnp.float32)
    cross = jax.random.normal(ks[1], (B, L_cross, d_model), jnp.float32)

    params = {
        "wq1": _init(ks[2], (d_model, d_model), d_model),
        "wk1": _init(ks[3], (d_model, d_model), d_model),
        "wv1": _init(ks[4], (d_model, d_model), d_model),
        "wo1": _init(ks[5], (d_model, d_model), d_model),
        "wq2": _init(ks[6], (d_model, d_model), d_model),
        "wk2": _init(ks[7], (d_model, d_model), d_model),
        "wv2": _init(ks[8], (d_model, d_model), d_model),
        "wo2": _init(ks[9], (d_model, d_model), d_model),
        "w_ff1": _init(ks[10], (d_model, d_ff), d_model),
        "w_ff2": _init(ks[11], (d_ff, d_model), d_ff),
        # torch Conv1d(d_model, c_out, kernel_size=3) weight layout: (c_out, d_model, 3)
        "w_proj": _init(ks[12], (c_out, d_model, 3), d_model * 3),
    }

    out_x, out_trend = decoder_layer(x, cross, params,
                                     n_heads=n_heads, kernel_size=moving_avg)
    out_x = jax.block_until_ready(out_x)
    out_trend = jax.block_until_ready(out_trend)

    ref_x, ref_trend = decoder_layer_ref(x, cross, params,
                                         n_heads=n_heads, kernel_size=moving_avg)

    assert out_x.shape == (B, L, d_model)
    assert out_trend.shape == (B, L, c_out)
    assert jnp.allclose(out_x, ref_x, atol=1e-3, rtol=1e-3)
    assert jnp.allclose(out_trend, ref_trend, atol=1e-3, rtol=1e-3)

    print("KERNEL_OK")
</pallas_src>

<mosaic_0001>
module attributes {stable_mosaic.version = 11 : i64} {
  func.func @kernel(%arg0: i32, %arg1: memref<1x8x32xf32, #tpu.memory_space<vmem>>, %arg2: memref<32x96xf32, #tpu.memory_space<vmem>>, %arg3: memref<32x32xf32, #tpu.memory_space<vmem>>, %arg4: memref<8x8xf32, #tpu.memory_space<vmem>>, %arg5: memref<1x8x32xf32, #tpu.memory_space<vmem>>, %arg6: memref<1x8x32xf32, #tpu.memory_space<vmem>>) attributes {dimension_semantics = [#tpu.dimension_semantics<parallel>], iteration_bounds = array<i64: 2>, scalar_prefetch = 0 : i64, scratch_operands = 0 : i64, tpu.core_type = #tpu.core_type<tc>, window_params = [{transform_indices = @transform_0, window_bounds = array<i64: 1, 8, 32>}, {pipeline_mode = #tpu.pipeline_mode<synchronous>, transform_indices = @transform_1, window_bounds = array<i64: 32, 96>}, {pipeline_mode = #tpu.pipeline_mode<synchronous>, transform_indices = @transform_2, window_bounds = array<i64: 32, 32>}, {pipeline_mode = #tpu.pipeline_mode<synchronous>, transform_indices = @transform_3, window_bounds = array<i64: 8, 8>}, {transform_indices = @transform_4, window_bounds = array<i64: 1, 8, 32>}, {transform_indices = @transform_5, window_bounds = array<i64: 1, 8, 32>}]} {
    %c0 = arith.constant 0 : index
    %c0_0 = arith.constant 0 : index
    %c0_1 = arith.constant 0 : index
    %0 = vector.load %arg1[%c0, %c0_0, %c0_1] : memref<1x8x32xf32, #tpu.memory_space<vmem>>, vector<1x8x32xf32>
    %1 = vector.shape_cast %0 : vector<1x8x32xf32> to vector<8x32xf32>
    %c0_2 = arith.constant 0 : index
    %c0_3 = arith.constant 0 : index
    %2 = vector.load %arg2[%c0_2, %c0_3] : memref<32x96xf32, #tpu.memory_space<vmem>>, vector<32x96xf32>
    %cst = arith.constant dense<0.000000e+00> : vector<8x96xf32>
    %3 = tpu.matmul %1, %2, %cst {dimension_numbers = #tpu.dot_dimension_numbers<[1], [0], [0], [1], [0, 0, 1, 1], [], []>, precision = #tpu.contract_precision<fp32>} : vector<8x32xf32>, vector<32x96xf32>, vector<8x96xf32> -> vector<8x96xf32>
    %4 = vector.extract_strided_slice %3 {offsets = [0, 0], sizes = [8, 32], strides = [1, 1]} : vector<8x96xf32> to vector<8x32xf32>
    %5 = vector.extract_strided_slice %3 {offsets = [0, 32], sizes = [8, 32], strides = [1, 1]} : vector<8x96xf32> to vector<8x32xf32>
    %6 = vector.extract_strided_slice %3 {offsets = [0, 64], sizes = [8, 32], strides = [1, 1]} : vector<8x96xf32> to vector<8x32xf32>
    %c0_4 = arith.constant 0 : index
    %c0_5 = arith.constant 0 : index
    %7 = vector.load %arg3[%c0_4, %c0_5] : memref<32x32xf32, #tpu.memory_space<vmem>>, vector<32x32xf32>
    %8 = vector.extract_strided_slice %4 {offsets = [0, 0], sizes = [8, 8], strides = [1, 1]} : vector<8x32xf32> to vector<8x8xf32>
    %9 = vector.extract_strided_slice %5 {offsets = [0, 0], sizes = [8, 8], strides = [1, 1]} : vector<8x32xf32> to vector<8x8xf32>
    %10 = vector.extract_strided_slice %6 {offsets = [0, 0], sizes = [8, 8], strides = [1, 1]} : vector<8x32xf32> to vector<8x8xf32>
    %cst_6 = arith.constant dense<0.000000e+00> : vector<8x8xf32>
    %11 = tpu.matmul %8, %9, %cst_6 {dimension_numbers = #tpu.dot_dimension_numbers<[1], [1], [0], [0], [0, 0, 1, 0], [], []>, precision = #tpu.contract_precision<fp32>} : vector<8x8xf32>, vector<8x8xf32>, vector<8x8xf32> -> vector<8x8xf32>
    %cst_7 = arith.constant 0.353553385 : f32
    %12 = vector.broadcast %cst_7 : f32 to vector<8x8xf32>
    %13 = arith.mulf %11, %12 : vector<8x8xf32>
    %cst_8 = arith.constant dense<0xFF800000> : vector<8xf32>
    %14 = vector.multi_reduction <maximumf>, %13, %cst_8 [1] : vector<8x8xf32> to vector<8xf32>
    %15 = vector.shape_cast %14 : vector<8xf32> to vector<8x1xf32>
    %16 = vector.broadcast %15 : vector<8x1xf32> to vector<8x8xf32>
    %17 = arith.subf %13, %16 : vector<8x8xf32>
    %18 = math.exp %17 : vector<8x8xf32>
    %cst_9 = arith.constant dense<0.000000e+00> : vector<8xf32>
    %19 = vector.multi_reduction <add>, %18, %cst_9 [1] : vector<8x8xf32> to vector<8xf32>
    %20 = vector.shape_cast %19 : vector<8xf32> to vector<8x1xf32>
    %21 = tpu.reciprocal %20 {approx = true} : vector<8x1xf32> -> vector<8x1xf32>
    %22 = arith.mulf %20, %21 : vector<8x1xf32>
    %cst_10 = arith.constant 2.000000e+00 : f32
    %23 = vector.broadcast %cst_10 : f32 to vector<8x1xf32>
    %24 = arith.subf %23, %22 : vector<8x1xf32>
    %25 = arith.mulf %21, %24 : vector<8x1xf32>
    %26 = vector.broadcast %25 : vector<8x1xf32> to vector<8x8xf32>
    %27 = arith.mulf %18, %26 : vector<8x8xf32>
    %cst_11 = arith.constant dense<0.000000e+00> : vector<8x8xf32>
    %28 = tpu.matmul %27, %10, %cst_11 {dimension_numbers = #tpu.dot_dimension_numbers<[1], [0], [0], [1], [0, 0, 1, 1], [], []>, precision = #tpu.contract_precision<fp32>} : vector<8x8xf32>, vector<8x8xf32>, vector<8x8xf32> -> vector<8x8xf32>
    %29 = vector.extract_strided_slice %7 {offsets = [0, 0], sizes = [8, 32], strides = [1, 1]} : vector<32x32xf32> to vector<8x32xf32>
    %cst_12 = arith.constant dense<0.000000e+00> : vector<8x32xf32>
    %30 = tpu.matmul %28, %29, %cst_12 {dimension_numbers = #tpu.dot_dimension_numbers<[1], [0], [0], [1], [0, 0, 1, 1], [], []>, precision = #tpu.contract_precision<fp32>} : vector<8x8xf32>, vector<8x32xf32>, vector<8x32xf32> -> vector<8x32xf32>
    %31 = vector.extract_strided_slice %4 {offsets = [0, 8], sizes = [8, 8], strides = [1, 1]} : vector<8x32xf32> to vector<8x8xf32>
    %32 = vector.extract_strided_slice %5 {offsets = [0, 8], sizes = [8, 8], strides = [1, 1]} : vector<8x32xf32> to vector<8x8xf32>
    %33 = vector.extract_strided_slice %6 {offsets = [0, 8], sizes = [8, 8], strides = [1, 1]} : vector<8x32xf32> to vector<8x8xf32>
    %cst_13 = arith.constant dense<0.000000e+00> : vector<8x8xf32>
    %34 = tpu.matmul %31, %32, %cst_13 {dimension_numbers = #tpu.dot_dimension_numbers<[1], [1], [0], [0], [0, 0, 1, 0], [], []>, precision = #tpu.contract_precision<fp32>} : vector<8x8xf32>, vector<8x8xf32>, vector<8x8xf32> -> vector<8x8xf32>
    %cst_14 = arith.constant 0.353553385 : f32
    %35 = vector.broadcast %cst_14 : f32 to vector<8x8xf32>
    %36 = arith.mulf %34, %35 : vector<8x8xf32>
    %cst_15 = arith.constant dense<0xFF800000> : vector<8xf32>
    %37 = vector.multi_reduction <maximumf>, %36, %cst_15 [1] : vector<8x8xf32> to vector<8xf32>
    %38 = vector.shape_cast %37 : vector<8xf32> to vector<8x1xf32>
    %39 = vector.broadcast %38 : vector<8x1xf32> to vector<8x8xf32>
    %40 = arith.subf %36, %39 : vector<8x8xf32>
    %41 = math.exp %40 : vector<8x8xf32>
    %cst_16 = arith.constant dense<0.000000e+00> : vector<8xf32>
    %42 = vector.multi_reduction <add>, %41, %cst_16 [1] : vector<8x8xf32> to vector<8xf32>
    %43 = vector.shape_cast %42 : vector<8xf32> to vector<8x1xf32>
    %44 = tpu.reciprocal %43 {approx = true} : vector<8x1xf32> -> vector<8x1xf32>
    %45 = arith.mulf %43, %44 : vector<8x1xf32>
    %cst_17 = arith.constant 2.000000e+00 : f32
    %46 = vector.broadcast %cst_17 : f32 to vector<8x1xf32>
    %47 = arith.subf %46, %45 : vector<8x1xf32>
    %48 = arith.mulf %44, %47 : vector<8x1xf32>
    %49 = vector.broadcast %48 : vector<8x1xf32> to vector<8x8xf32>
    %50 = arith.mulf %41, %49 : vector<8x8xf32>
    %cst_18 = arith.constant dense<0.000000e+00> : vector<8x8xf32>
    %51 = tpu.matmul %50, %33, %cst_18 {dimension_numbers = #tpu.dot_dimension_numbers<[1], [0], [0], [1], [0, 0, 1, 1], [], []>, precision = #tpu.contract_precision<fp32>} : vector<8x8xf32>, vector<8x8xf32>, vector<8x8xf32> -> vector<8x8xf32>
    %52 = vector.extract_strided_slice %7 {offsets = [8, 0], sizes = [8, 32], strides = [1, 1]} : vector<32x32xf32> to vector<8x32xf32>
    %cst_19 = arith.constant dense<0.000000e+00> : vector<8x32xf32>
    %53 = tpu.matmul %51, %52, %cst_19 {dimension_numbers = #tpu.dot_dimension_numbers<[1], [0], [0], [1], [0, 0, 1, 1], [], []>, precision = #tpu.contract_precision<fp32>} : vector<8x8xf32>, vector<8x32xf32>, vector<8x32xf32> -> vector<8x32xf32>
    %54 = arith.addf %30, %53 : vector<8x32xf32>
    %55 = vector.extract_strided_slice %4 {offsets = [0, 16], sizes = [8, 8], strides = [1, 1]} : vector<8x32xf32> to vector<8x8xf32>
    %56 = vector.extract_strided_slice %5 {offsets = [0, 16], sizes = [8, 8], strides = [1, 1]} : vector<8x32xf32> to vector<8x8xf32>
    %57 = vector.extract_strided_slice %6 {offsets = [0, 16], sizes = [8, 8], strides = [1, 1]} : vector<8x32xf32> to vector<8x8xf32>
    %cst_20 = arith.constant dense<0.000000e+00> : vector<8x8xf32>
    %58 = tpu.matmul %55, %56, %cst_20 {dimension_numbers = #tpu.dot_dimension_numbers<[1], [1], [0], [0], [0, 0, 1, 0], [], []>, precision = #tpu.contract_precision<fp32>} : vector<8x8xf32>, vector<8x8xf32>, vector<8x8xf32> -> vector<8x8xf32>
    %cst_21 = arith.constant 0.353553385 : f32
    %59 = vector.broadcast %cst_21 : f32 to vector<8x8xf32>
    %60 = arith.mulf %58, %59 : vector<8x8xf32>
    %cst_22 = arith.constant dense<0xFF800000> : vector<8xf32>
    %61 = vector.multi_reduction <maximumf>, %60, %cst_22 [1] : vector<8x8xf32> to vector<8xf32>
    %62 = vector.shape_cast %61 : vector<8xf32> to vector<8x1xf32>
    %63 = vector.broadcast %62 : vector<8x1xf32> to vector<8x8xf32>
    %64 = arith.subf %60, %63 : vector<8x8xf32>
    %65 = math.exp %64 : vector<8x8xf32>
    %cst_23 = arith.constant dense<0.000000e+00> : vector<8xf32>
    %66 = vector.multi_reduction <add>, %65, %cst_23 [1] : vector<8x8xf32> to vector<8xf32>
    %67 = vector.shape_cast %66 : vector<8xf32> to vector<8x1xf32>
    %68 = tpu.reciprocal %67 {approx = true} : vector<8x1xf32> -> vector<8x1xf32>
    %69 = arith.mulf %67, %68 : vector<8x1xf32>
    %cst_24 = arith.constant 2.000000e+00 : f32
    %70 = vector.broadcast %cst_24 : f32 to vector<8x1xf32>
    %71 = arith.subf %70, %69 : vector<8x1xf32>
    %72 = arith.mulf %68, %71 : vector<8x1xf32>
    %73 = vector.broadcast %72 : vector<8x1xf32> to vector<8x8xf32>
    %74 = arith.mulf %65, %73 : vector<8x8xf32>
    %cst_25 = arith.constant dense<0.000000e+00> : vector<8x8xf32>
    %75 = tpu.matmul %74, %57, %cst_25 {dimension_numbers = #tpu.dot_dimension_numbers<[1], [0], [0], [1], [0, 0, 1, 1], [], []>, precision = #tpu.contract_precision<fp32>} : vector<8x8xf32>, vector<8x8xf32>, vector<8x8xf32> -> vector<8x8xf32>
    %76 = vector.extract_strided_slice %7 {offsets = [16, 0], sizes = [8, 32], strides = [1, 1]} : vector<32x32xf32> to vector<8x32xf32>
    %cst_26 = arith.constant dense<0.000000e+00> : vector<8x32xf32>
    %77 = tpu.matmul %75, %76, %cst_26 {dimension_numbers = #tpu.dot_dimension_numbers<[1], [0], [0], [1], [0, 0, 1, 1], [], []>, precision = #tpu.contract_precision<fp32>} : vector<8x8xf32>, vector<8x32xf32>, vector<8x32xf32> -> vector<8x32xf32>
    %78 = arith.addf %54, %77 : vector<8x32xf32>
    %79 = vector.extract_strided_slice %4 {offsets = [0, 24], sizes = [8, 8], strides = [1, 1]} : vector<8x32xf32> to vector<8x8xf32>
    %80 = vector.extract_strided_slice %5 {offsets = [0, 24], sizes = [8, 8], strides = [1, 1]} : vector<8x32xf32> to vector<8x8xf32>
    %81 = vector.extract_strided_slice %6 {offsets = [0, 24], sizes = [8, 8], strides = [1, 1]} : vector<8x32xf32> to vector<8x8xf32>
    %cst_27 = arith.constant dense<0.000000e+00> : vector<8x8xf32>
    %82 = tpu.matmul %79, %80, %cst_27 {dimension_numbers = #tpu.dot_dimension_numbers<[1], [1], [0], [0], [0, 0, 1, 0], [], []>, precision = #tpu.contract_precision<fp32>} : vector<8x8xf32>, vector<8x8xf32>, vector<8x8xf32> -> vector<8x8xf32>
    %cst_28 = arith.constant 0.353553385 : f32
    %83 = vector.broadcast %cst_28 : f32 to vector<8x8xf32>
    %84 = arith.mulf %82, %83 : vector<8x8xf32>
    %cst_29 = arith.constant dense<0xFF800000> : vector<8xf32>
    %85 = vector.multi_reduction <maximumf>, %84, %cst_29 [1] : vector<8x8xf32> to vector<8xf32>
    %86 = vector.shape_cast %85 : vector<8xf32> to vector<8x1xf32>
    %87 = vector.broadcast %86 : vector<8x1xf32> to vector<8x8xf32>
    %88 = arith.subf %84, %87 : vector<8x8xf32>
    %89 = math.exp %88 : vector<8x8xf32>
    %cst_30 = arith.constant dense<0.000000e+00> : vector<8xf32>
    %90 = vector.multi_reduction <add>, %89, %cst_30 [1] : vector<8x8xf32> to vector<8xf32>
    %91 = vector.shape_cast %90 : vector<8xf32> to vector<8x1xf32>
    %92 = tpu.reciprocal %91 {approx = true} : vector<8x1xf32> -> vector<8x1xf32>
    %93 = arith.mulf %91, %92 : vector<8x1xf32>
    %cst_31 = arith.constant 2.000000e+00 : f32
    %94 = vector.broadcast %cst_31 : f32 to vector<8x1xf32>
    %95 = arith.subf %94, %93 : vector<8x1xf32>
    %96 = arith.mulf %92, %95 : vector<8x1xf32>
    %97 = vector.broadcast %96 : vector<8x1xf32> to vector<8x8xf32>
    %98 = arith.mulf %89, %97 : vector<8x8xf32>
    %cst_32 = arith.constant dense<0.000000e+00> : vector<8x8xf32>
    %99 = tpu.matmul %98, %81, %cst_32 {dimension_numbers = #tpu.dot_dimension_numbers<[1], [0], [0], [1], [0, 0, 1, 1], [], []>, precision = #tpu.contract_precision<fp32>} : vector<8x8xf32>, vector<8x8xf32>, vector<8x8xf32> -> vector<8x8xf32>
    %100 = vector.extract_strided_slice %7 {offsets = [24, 0], sizes = [8, 32], strides = [1, 1]} : vector<32x32xf32> to vector<8x32xf32>
    %cst_33 = arith.constant dense<0.000000e+00> : vector<8x32xf32>
    %101 = tpu.matmul %99, %100, %cst_33 {dimension_numbers = #tpu.dot_dimension_numbers<[1], [0], [0], [1], [0, 0, 1, 1], [], []>, precision = #tpu.contract_precision<fp32>} : vector<8x8xf32>, vector<8x32xf32>, vector<8x32xf32> -> vector<8x32xf32>
    %102 = arith.addf %78, %101 : vector<8x32xf32>
    %103 = arith.addf %1, %102 : vector<8x32xf32>
    %c0_34 = arith.constant 0 : index
    %c0_35 = arith.constant 0 : index
    %104 = vector.load %arg4[%c0_34, %c0_35] : memref<8x8xf32, #tpu.memory_space<vmem>>, vector<8x8xf32>
    %cst_36 = arith.constant dense<0.000000e+00> : vector<8x32xf32>
    %105 = tpu.matmul %104, %103, %cst_36 {dimension_numbers = #tpu.dot_dimension_numbers<[1], [0], [0], [1], [0, 0, 1, 1], [], []>, precision = #tpu.contract_precision<fp32>} : vector<8x8xf32>, vector<8x32xf32>, vector<8x32xf32> -> vector<8x32xf32>
    %106 = arith.subf %103, %105 : vector<8x32xf32>
    %c0_37 = arith.constant 0 : index
    %c0_38 = arith.constant 0 : index
    %c0_39 = arith.constant 0 : index
    %107 = vector.load %arg5[%c0_37, %c0_38, %c0_39] : memref<1x8x32xf32, #tpu.memory_space<vmem>>, vector<1x8x32xf32>
    %108 = vector.shape_cast %107 : vector<1x8x32xf32> to vector<8x32xf32>
    %109 = vector.shape_cast %106 : vector<8x32xf32> to vector<1x8x32xf32>
    tpu.vector_store %arg5[%c0_37, %c0_38, %c0_39], %109 {strides = array<i32>} : memref<1x8x32xf32, #tpu.memory_space<vmem>>, vector<1x8x32xf32>,
    %c0_40 = arith.constant 0 : index
    %c0_41 = arith.constant 0 : index
    %c0_42 = arith.constant 0 : index
    %110 = vector.load %arg6[%c0_40, %c0_41, %c0_42] : memref<1x8x32xf32, #tpu.memory_space<vmem>>, vector<1x8x32xf32>
    %111 = vector.shape_cast %110 : vector<1x8x32xf32> to vector<8x32xf32>
    %112 = vector.shape_cast %105 : vector<8x32xf32> to vector<1x8x32xf32>
    tpu.vector_store %arg6[%c0_40, %c0_41, %c0_42], %112 {strides = array<i32>} : memref<1x8x32xf32, #tpu.memory_space<vmem>>, vector<1x8x32xf32>,
    return
  }
  func.func @transform_0(%arg0: i32) -> (i32, i32, i32) {
    %c0_i32 = arith.constant 0 : i32
    %c0_i32_0 = arith.constant 0 : i32
    %c0_i32_1 = arith.constant 0 : i32
    return %arg0, %c0_i32, %c0_i32_0 : i32, i32, i32
  }
  func.func @transform_1(%arg0: i32) -> (i32, i32) {
    %c0_i32 = arith.constant 0 : i32
    %c0_i32_0 = arith.constant 0 : i32
    %c0_i32_1 = arith.constant 0 : i32
    return %c0_i32, %c0_i32_0 : i32, i32
  }
  func.func @transform_2(%arg0: i32) -> (i32, i32) {
    %c0_i32 = arith.constant 0 : i32
    %c0_i32_0 = arith.constant 0 : i32
    %c0_i32_1 = arith.constant 0 : i32
    return %c0_i32, %c0_i32_0 : i32, i32
  }
  func.func @transform_3(%arg0: i32) -> (i32, i32) {
    %c0_i32 = arith.constant 0 : i32
    %c0_i32_0 = arith.constant 0 : i32
    %c0_i32_1 = arith.constant 0 : i32
    return %c0_i32, %c0_i32_0 : i32, i32
  }
  func.func @transform_4(%arg0: i32) -> (i32, i32, i32) {
    %c0_i32 = arith.constant 0 : i32
    %c0_i32_0 = arith.constant 0 : i32
    %c0_i32_1 = arith.constant 0 : i32
    return %arg0, %c0_i32, %c0_i32_0 : i32, i32, i32
  }
  func.func @transform_5(%arg0: i32) -> (i32, i32, i32) {
    %c0_i32 = arith.constant 0 : i32
    %c0_i32_0 = arith.constant 0 : i32
    %c0_i32_1 = arith.constant 0 : i32
    return %arg0, %c0_i32, %c0_i32_0 : i32, i32, i32
  }
}

</mosaic_0001>

<llo_original>
// kernel: tpu_custom_call.1
$region0: #{tpu_custom_call.1}
  #allocation0 [shape = 'u32[]', space=smem, size = 0x4, offset = 0x4, fixed_abs, tag = 'smem constant byte address 0x4 - core index']
  #allocation1 [shape = 'u32[72,128]{1,0:T(1,128)}', space=vmem, size = 0x9000, scoped, tag = 'internal scratch']
  %s0 = inlined_call_operand.hbm [shape: f32[2,8,32], index: 0, kind: input, shape index: {}]
  %s1 = inlined_call_operand.hbm [shape: f32[32,96], index: 1, kind: input, shape index: {}]
  %s2 = inlined_call_operand.hbm [shape: f32[32,32], index: 2, kind: input, shape index: {}]
  %s3 = inlined_call_operand.hbm [shape: f32[8,8], index: 3, kind: input, shape index: {}]
  %s4 = inlined_call_operand.hbm [shape: f32[2,8,32], index: 4, kind: output, shape index: {0}]
  %s5 = inlined_call_operand.hbm [shape: f32[2,8,32], index: 5, kind: output, shape index: {1}]
  %6 = xla_tuple %s4, %s5
  %s7 = sld [smem:[#allocation0]]
  $region73: #{tpu_custom_call.1} parent=0
    _
  %s9 = ssub.s32 1, %s7
  %s10 = scalar_select 0, %s9, %s7
  $region1: #{tpu_custom_call.1} parent=0
    #allocation2 [shape = 'u8[8192]{0}', space=vmem, size = 0x2000, scoped, tag = 'input window, operand 0']
    #allocation3 [shape = 's32[2]{0}', space=sflag, size = 0x8, scoped, tag = 'scoped memory for tpu_custom_call.1']
    #allocation4 [shape = 's32[2]{0}', space=sflag, size = 0x8, scoped, tag = 'scoped memory for tpu_custom_call.1']
    #allocation5 [shape = 'u8[16384]{0}', space=vmem, size = 0x4000, scoped, tag = 'input window, operand 1, single buffered']
    #allocation6 [shape = 's32[1]{0}', space=sflag, size = 0x4, scoped, tag = 'scoped memory for tpu_custom_call.1']
    #allocation7 [shape = 'u8[16384]{0}', space=vmem, size = 0x4000, scoped, tag = 'input window, operand 2, single buffered']
    #allocation8 [shape = 'u8[4096]{0}', space=vmem, size = 0x1000, scoped, tag = 'input window, operand 3, single buffered']
    #allocation9 [shape = 's32[1]{0}', space=sflag, size = 0x4, scoped, tag = 'scoped memory for tpu_custom_call.1']
    #allocation10 [shape = 'u8[8192]{0}', space=vmem, size = 0x2000, scoped, tag = 'output window, operand 0']
    #allocation11 [shape = 'u8[8192]{0}', space=vmem, size = 0x2000, scoped, tag = 'output window, operand 1']
    #allocation12 [shape = 's32[2]{0}', space=sflag, size = 0x8, scoped, tag = 'scoped memory for tpu_custom_call.1']
    %11 = vsyncpa [#allocation3], 0
    %s12 = scalar_lea.sflag [#allocation3], 1
    %13 = vsyncpa %s12, 0
    %14 = vsyncpa [#allocation6], 0
    %15 = vsyncpa [#allocation9], 0
    %16 = vsyncpa [#allocation4], 0
    %s17 = scalar_lea.sflag [#allocation4], 1
    %18 = vsyncpa %s17, 0
    %19 = vsyncpa [#allocation12], 0
    %s20 = scalar_lea.sflag [#allocation12], 1
    %21 = vsyncpa %s20, 0
    loop: start=0, step=1, limit=4
    $region2: #{tpu_custom_call.1} parent=1 // loop_pre_header
      _
    $region3: #{tpu_custom_call.1} parent=1 // loop_header
      %s23 = sphi 0, %s27
      %p24 = scmp.ge.s32.totalorder %s23, 4
      %s33 = sphi 0, %s35
      %s36 = sphi 0, %s33
      %s37 = sphi 0, %s36
      %s53 = sphi 0, %s37
      %s57 = sphi 0, %s57
      %s59 = sphi 0, %s57
      %s60 = sphi 0, %s59
      %s74 = sphi 0, %s60
      %s78 = sphi 0, %s78
      %s80 = sphi 0, %s78
      %s81 = sphi 0, %s80
      %s95 = sphi 0, %s81
      %s99 = sphi 0, %s99
      %s101 = sphi 0, %s99
      %s102 = sphi 0, %s101
      %s116 = sphi 0, %s102
      %s122 = sphi 0, %s124
      %s125 = sphi 0, %s122
      %s126 = sphi 0, %s125
      %s142 = sphi 0, %s126
      %s148 = sphi 0, %s150
      %s151 = sphi 0, %s148
      %s152 = sphi 0, %s151
      %s168 = sphi 0, %s152
    $region4: #{tpu_custom_call.1} parent=1 // loop_header_branch
      %26 = sbr.rel (%p24) target = $region8
    $region5: #{tpu_custom_call.1} parent=1 // loop_body
      %s28 = ssub.s32 %s23, 1
      %s29 = ssub.s32 %s23, 2
      %s30 = sadd.s32 %s23, 1
      %s31 = ssub.s32 %s23, %s30
      %p32 = scmp.eq.s32.totalorder %s31, 0
      %s34 = sadd.s32 %s33, 1
      %s35 = scalar_select %p32, %s33, %s34
      %p38 = pneg %p32
      %p39 = scmp.eq.s32.totalorder %s23, 1
      %p40 = por %p38, %p39
      %p41 = scmp.ne.s32.totalorder %s33, %s36
      %p42 = scmp.eq.s32.totalorder %s23, 0
      %p43 = por %p41, %p42
      %p44 = scmp.ne.s32.totalorder %s33, %s36
      %p45 = scmp.eq.s32.totalorder %s28, 1
      %p46 = por %p44, %p45
      %p47 = scmp.ne.s32.totalorder %s36, %s37
      %p48 = scmp.eq.s32.totalorder %s28, 0
      %p49 = por %p47, %p48
      %p50 = scmp.ne.s32.totalorder %s36, %s37
      %p51 = scmp.eq.s32.totalorder %s29, 1
      %p52 = por %p50, %p51
      %p54 = scmp.ne.s32.totalorder %s37, %s53
      %p55 = scmp.eq.s32.totalorder %s29, 0
      %p56 = por %p54, %p55
      %s58 = sadd.s32 %s57, 1
      %p61 = scmp.eq.s32.totalorder %s23, 1
      %p62 = scmp.ne.s32.totalorder %s57, %s59
      %p63 = scmp.eq.s32.totalorder %s23, 0
      %p64 = por %p62, %p63
      %p65 = scmp.ne.s32.totalorder %s57, %s59
      %p66 = scmp.eq.s32.totalorder %s28, 1
      %p67 = por %p65, %p66
      %p68 = scmp.ne.s32.totalorder %s59, %s60
      %p69 = scmp.eq.s32.totalorder %s28, 0
      %p70 = por %p68, %p69
      %p71 = scmp.ne.s32.totalorder %s59, %s60
      %p72 = scmp.eq.s32.totalorder %s29, 1
      %p73 = por %p71, %p72
      %p75 = scmp.ne.s32.totalorder %s60, %s74
      %p76 = scmp.eq.s32.totalorder %s29, 0
      %p77 = por %p75, %p76
      %s79 = sadd.s32 %s78, 1
      %p82 = scmp.eq.s32.totalorder %s23, 1
      %p83 = scmp.ne.s32.totalorder %s78, %s80
      %p84 = scmp.eq.s32.totalorder %s23, 0
      %p85 = por %p83, %p84
      %p86 = scmp.ne.s32.totalorder %s78, %s80
      %p87 = scmp.eq.s32.totalorder %s28, 1
      %p88 = por %p86, %p87
      %p89 = scmp.ne.s32.totalorder %s80, %s81
      %p90 = scmp.eq.s32.totalorder %s28, 0
      %p91 = por %p89, %p90
      %p92 = scmp.ne.s32.totalorder %s80, %s81
      %p93 = scmp.eq.s32.totalorder %s29, 1
      %p94 = por %p92, %p93
      %p96 = scmp.ne.s32.totalorder %s81, %s95
      %p97 = scmp.eq.s32.totalorder %s29, 0
      %p98 = por %p96, %p97
      %s100 = sadd.s32 %s99, 1
      %p103 = scmp.eq.s32.totalorder %s23, 1
      %p104 = scmp.ne.s32.totalorder %s99, %s101
      %p105 = scmp.eq.s32.totalorder %s23, 0
      %p106 = por %p104, %p105
      %p107 = scmp.ne.s32.totalorder %s99, %s101
      %p108 = scmp.eq.s32.totalorder %s28, 1
      %p109 = por %p107, %p108
      %p110 = scmp.ne.s32.totalorder %s101, %s102
      %p111 = scmp.eq.s32.totalorder %s28, 0
      %p112 = por %p110, %p111
      %p113 = scmp.ne.s32.totalorder %s101, %s102
      %p114 = scmp.eq.s32.totalorder %s29, 1
      %p115 = por %p113, %p114
      %p117 = scmp.ne.s32.totalorder %s102, %s116
      %p118 = scmp.eq.s32.totalorder %s29, 0
      %p119 = por %p117, %p118
      %s120 = ssub.s32 %s23, %s30
      %p121 = scmp.eq.s32.totalorder %s120, 0
      %s123 = sadd.s32 %s122, 1
      %s124 = scalar_select %p121, %s122, %s123
      %p127 = pneg %p121
      %p128 = scmp.eq.s32.totalorder %s23, 1
      %p129 = por %p127, %p128
      %p130 = scmp.ne.s32.totalorder %s122, %s125
      %p131 = scmp.eq.s32.totalorder %s23, 0
      %p132 = por %p130, %p131
      %p133 = scmp.ne.s32.totalorder %s122, %s125
      %p134 = scmp.eq.s32.totalorder %s28, 1
      %p135 = por %p133, %p134
      %p136 = scmp.ne.s32.totalorder %s125, %s126
      %p137 = scmp.eq.s32.totalorder %s28, 0
      %p138 = por %p136, %p137
      %p139 = scmp.ne.s32.totalorder %s125, %s126
      %p140 = scmp.eq.s32.totalorder %s29, 1
      %p141 = por %p139, %p140
      %p143 = scmp.ne.s32.totalorder %s126, %s142
      %p144 = scmp.eq.s32.totalorder %s29, 0
      %p145 = por %p143, %p144
      %s146 = ssub.s32 %s23, %s30
      %p147 = scmp.eq.s32.totalorder %s146, 0
      %s149 = sadd.s32 %s148, 1
      %s150 = scalar_select %p147, %s148, %s149
      %p153 = pneg %p147
      %p154 = scmp.eq.s32.totalorder %s23, 1
      %p155 = por %p153, %p154
      %p156 = scmp.ne.s32.totalorder %s148, %s151
      %p157 = scmp.eq.s32.totalorder %s23, 0
      %p158 = por %p156, %p157
      %p159 = scmp.ne.s32.totalorder %s148, %s151
      %p160 = scmp.eq.s32.totalorder %s28, 1
      %p161 = por %p159, %p160
      %p162 = scmp.ne.s32.totalorder %s151, %s152
      %p163 = scmp.eq.s32.totalorder %s28, 0
      %p164 = por %p162, %p163
      %p165 = scmp.ne.s32.totalorder %s151, %s152
      %p166 = scmp.eq.s32.totalorder %s29, 1
      %p167 = por %p165, %p166
      %p169 = scmp.ne.s32.totalorder %s152, %s168
      %p170 = scmp.eq.s32.totalorder %s29, 0
      %p171 = por %p169, %p170
      %p172 = scmp.le.s32.totalorder 1, %s23
      %p173 = scmp.lt.s32.totalorder %s23, 3
      %p174 = pnand %p172, %p173
      %p175 = pneg %p174
      // Predicated region
      $region9: #{tpu_custom_call.1} parent=5 // pred_check
        _
      $region10: #{tpu_custom_call.1} parent=5 // pred_check_branch
        %177 = sbr.rel (%p174) target = $region12
      $region11: #{tpu_custom_call.1} parent=5 // pred_region
        %s178 = ssub.s32 %s23, 1
        // Predicated region
        $region13: #{tpu_custom_call.1} parent=11 // pred_check
          %p179 = pneg %p70
        $region14: #{tpu_custom_call.1} parent=11 // pred_check_branch
          %181 = sbr.rel (%p179) target = $region16
        $region15: #{tpu_custom_call.1} parent=11 // pred_region
          %183 = vsyncadd [#allocation6], 0
          %s184 = sshll.u32 %s1, 4
          %s185 = int_to_ptr.hbm [resolvable:$true] %s184
          %s186 = sshll.u32 [#allocation5], 4
          %s187 = int_to_ptr.vmem [resolvable:$true] %s186
          %192 = dma.hbm_to_vmem [thread:$0]  %s185, 512, %s187, [#allocation6], 128, 128, 8
        $region16: #{tpu_custom_call.1} parent=11 // pred_fallthru
          _
        // Predicated region
        $region17: #{tpu_custom_call.1} parent=11 // pred_check
          %p193 = pneg %p91
        $region18: #{tpu_custom_call.1} parent=11 // pred_check_branch
          %195 = sbr.rel (%p193) target = $region20
        $region19: #{tpu_custom_call.1} parent=11 // pred_region
          %197 = vsyncadd [#allocation6], 0
          %s198 = sshll.u32 %s2, 4
          %s199 = int_to_ptr.hbm [resolvable:$true] %s198
          %s200 = sshll.u32 [#allocation7], 4
          %s201 = int_to_ptr.vmem [resolvable:$true] %s200
          %206 = dma.hbm_to_vmem [thread:$0]  %s199, 512, %s201, [#allocation6], 128, 128, 8
        $region20: #{tpu_custom_call.1} parent=11 // pred_fallthru
          _
        // Predicated region
        $region21: #{tpu_custom_call.1} parent=11 // pred_check
          %p207 = pneg %p112
        $region22: #{tpu_custom_call.1} parent=11 // pred_check_branch
          %209 = sbr.rel (%p207) target = $region24
        $region23: #{tpu_custom_call.1} parent=11 // pred_region
          %211 = vsyncadd [#allocation9], 0
          %s213 = sshll.u32 %s3, 4
          %s214 = int_to_ptr.hbm [resolvable:$true] %s213
          %s215 = sshll.u32 [#allocation8], 4
          %s216 = int_to_ptr.vmem [resolvable:$true] %s215
          %218 = dma.hbm_to_vmem [thread:$0]  %s214, 128, %s216, [#allocation9]
        $region24: #{tpu_custom_call.1} parent=11 // pred_fallthru
          _
      $region12: #{tpu_custom_call.1} parent=5 // pred_fallthru
        _
      %p219 = scmp.lt.s32.totalorder %s23, 2
      // Predicated region
      $region25: #{tpu_custom_call.1} parent=5 // pred_check
        %p220 = pneg %p219
      $region26: #{tpu_custom_call.1} parent=5 // pred_check_branch
        %222 = sbr.rel (%p220) target = $region28
      $region27: #{tpu_custom_call.1} parent=5 // pred_region
        // Predicated region
        $region29: #{tpu_custom_call.1} parent=27 // pred_check
          %p223 = pneg %p43
        $region30: #{tpu_custom_call.1} parent=27 // pred_check_branch
          %225 = sbr.rel (%p223) target = $region32
        $region31: #{tpu_custom_call.1} parent=27 // pred_region
          %s226 = sand.u32 %s33, 1
          %s227 = scalar_lea.sflag [#allocation3], %s226
          %s228 = sand.u32 %s33, 1
          %s229 = smul.addr %s228, 8
          %s230 = scalar_lea.vmem [#allocation2], %s229
          %232 = vsyncadd %s227, 0
          %s233 = smul.addr %s23, 8
          %s234 = scalar_lea.hbm %s0, %s233
          %s236 = sshll.u32 %s234, 4
          %s237 = int_to_ptr.hbm [resolvable:$true] %s236
          %s238 = sshll.u32 %s230, 4
          %s239 = int_to_ptr.vmem [resolvable:$true] %s238
          %241 = dma.hbm_to_vmem [thread:$0]  %s237, 128, %s239, %s227
        $region32: #{tpu_custom_call.1} parent=27 // pred_fallthru
          _
      $region28: #{tpu_custom_call.1} parent=5 // pred_fallthru
        _
      %p242 = scmp.le.s32.totalorder 1, %s23
      %p243 = scmp.lt.s32.totalorder %s23, 3
      %p244 = pnand %p242, %p243
      %p245 = pneg %p244
      // Predicated region
      $region33: #{tpu_custom_call.1} parent=5 // pred_check
        _
      $region34: #{tpu_custom_call.1} parent=5 // pred_check_branch
        %247 = sbr.rel (%p244) target = $region36
      $region35: #{tpu_custom_call.1} parent=5 // pred_region
        %s248 = ssub.s32 %s23, 1
        %s249 = sand.u32 %s36, 1
        %s250 = scalar_lea.sflag [#allocation3], %s249
        %s251 = sand.u32 %s36, 1
        %s252 = smul.addr %s251, 8
        %s253 = scalar_lea.vmem [#allocation2], %s252
        // Predicated region
        $region37: #{tpu_custom_call.1} parent=35 // pred_check
          %p254 = pneg %p49
        $region38: #{tpu_custom_call.1} parent=35 // pred_check_branch
          %256 = sbr.rel (%p254) target = $region40
        $region39: #{tpu_custom_call.1} parent=35 // pred_region
          %258 = dma.done %s250, 128
        $region40: #{tpu_custom_call.1} parent=35 // pred_fallthru
          _
        // Predicated region
        $region41: #{tpu_custom_call.1} parent=35 // pred_check
          %p259 = pneg %p70
        $region42: #{tpu_custom_call.1} parent=35 // pred_check_branch
          %261 = sbr.rel (%p259) target = $region44
        $region43: #{tpu_custom_call.1} parent=35 // pred_region
          %263 = dma.done [#allocation6], 512
        $region44: #{tpu_custom_call.1} parent=35 // pred_fallthru
          _
        // Predicated region
        $region45: #{tpu_custom_call.1} parent=35 // pred_check
          %p264 = pneg %p91
        $region46: #{tpu_custom_call.1} parent=35 // pred_check_branch
          %266 = sbr.rel (%p264) target = $region48
        $region47: #{tpu_custom_call.1} parent=35 // pred_region
          %268 = dma.done [#allocation6], 512
        $region48: #{tpu_custom_call.1} parent=35 // pred_fallthru
          _
        // Predicated region
        $region49: #{tpu_custom_call.1} parent=35 // pred_check
          %p269 = pneg %p112
        $region50: #{tpu_custom_call.1} parent=35 // pred_check_branch
          %271 = sbr.rel (%p269) target = $region52
        $region51: #{tpu_custom_call.1} parent=35 // pred_region
          %273 = dma.done [#allocation9], 128
        $region52: #{tpu_custom_call.1} parent=35 // pred_fallthru
          _
        %s274 = sand.u32 %s36, 1
        %s275 = scalar_lea.sflag [#allocation3], %s274
        %s276 = sand.u32 %s36, 1
        %s277 = smul.addr %s276, 8
        %s278 = scalar_lea.vmem [#allocation2], %s277
        %p279 = pneg %p49
        %p280 = pneg %p46
        %p281 = pneg %p70
        %p282 = pneg %p67
        %p283 = pneg %p91
        %p284 = pneg %p88
        %p285 = pneg %p112
        %p286 = pneg %p109
        %p287 = pneg %p138
        %p288 = pneg %p135
        %s289 = sand.u32 %s125, 1
        %s290 = scalar_lea.sflag [#allocation4], %s289
        %s291 = sand.u32 %s125, 1
        %s292 = smul.addr %s291, 8
        %s293 = scalar_lea.vmem [#allocation10], %s292
        %p294 = pneg %p164
        %p295 = pneg %p161
        %s296 = sand.u32 %s151, 1
        %s297 = scalar_lea.sflag [#allocation12], %s296
        %s298 = sand.u32 %s151, 1
        %s299 = smul.addr %s298, 8
        %s300 = scalar_lea.vmem [#allocation11], %s299
        %v301 = vld [vmem:[%s253] sm:$0xff]
        %v302 = vld [vmem:[#allocation5] sm:$0xff]
        %v303 = vld [vmem:[#allocation5 + $0x8] sm:$0xff]
        %v304 = vld [vmem:[#allocation5 + $0x10] sm:$0xff]
        %v305 = vld [vmem:[#allocation5 + $0x18] sm:$0xff]
        %vm306 = vcmask 261120
        %v308 = vsel %vm306, %v301, 0
        %310 = vmatpush.msra.mxu0 0.0
        %311 = vmatpush.msra.mxu0 0.0
        %312 = vmatpush.msra.mxu0 0.0
        %313 = vmatpush.msra.mxu0 0.0
        %314 = vmatpush.msra.mxu0 0.0
        %315 = vmatpush.msra.mxu0 0.0
        %316 = vmatpush.msra.mxu0 0.0
        %317 = vmatpush.msra.mxu0 0.0
        %318 = vmatpush.msra.mxu0 0.0
        %319 = vmatpush.msra.mxu0 0.0
        %320 = vmatpush.msra.mxu0 0.0
        %321 = vmatpush.msra.mxu0 0.0
        %v322 = vand.u32 %v305, 4294901760
        %323 = vmatpush.msra.mxu0 %v322
        %v324 = vand.u32 %v304, 4294901760
        %325 = vmatpush.msra.mxu0 %v324
        %v326 = vand.u32 %v303, 4294901760
        %327 = vmatpush.msra.mxu0 %v326
        %v328 = vand.u32 %v302, 4294901760
        %329 = vmatpush.msra.mxu0 %v328
        %v330 = vand.u32 %v308, 4294901760
        %v331 = vsub.f32 %v308, %v330
        %v332 = vand.u32 %v331, 4294901760
        %v333 = vsub.f32 %v331, %v332
        %v334 = vand.u32 %v333, 4294901760
        %335 = vmatmul.f32.gmra.mxu0 %v334
        %v336 = vpop.f32.mrf.mxu0
        %v337 = vadd.f32 0.0, %v336
        %338 = vdwg.mxu0
        %339 = vmatpush.msra.mxu0 0.0
        %340 = vmatpush.msra.mxu0 0.0
        %341 = vmatpush.msra.mxu0 0.0
        %342 = vmatpush.msra.mxu0 0.0
        %343 = vmatpush.msra.mxu0 0.0
        %344 = vmatpush.msra.mxu0 0.0
        %345 = vmatpush.msra.mxu0 0.0
        %346 = vmatpush.msra.mxu0 0.0
        %347 = vmatpush.msra.mxu0 0.0
        %348 = vmatpush.msra.mxu0 0.0
        %349 = vmatpush.msra.mxu0 0.0
        %350 = vmatpush.msra.mxu0 0.0
        %v351 = vand.u32 %v305, 4294901760
        %v352 = vsub.f32 %v305, %v351
        %v353 = vand.u32 %v352, 4294901760
        %v354 = vsub.f32 %v352, %v353
        %v355 = vand.u32 %v354, 4294901760
        %356 = vmatpush.msra.mxu0 %v355
        %v357 = vand.u32 %v304, 4294901760
        %v358 = vsub.f32 %v304, %v357
        %v359 = vand.u32 %v358, 4294901760
        %v360 = vsub.f32 %v358, %v359
        %v361 = vand.u32 %v360, 4294901760
        %362 = vmatpush.msra.mxu0 %v361
        %v363 = vand.u32 %v303, 4294901760
        %v364 = vsub.f32 %v303, %v363
        %v365 = vand.u32 %v364, 4294901760
        %v366 = vsub.f32 %v364, %v365
        %v367 = vand.u32 %v366, 4294901760
        %368 = vmatpush.msra.mxu0 %v367
        %v369 = vand.u32 %v302, 4294901760
        %v370 = vsub.f32 %v302, %v369
        %v371 = vand.u32 %v370, 4294901760
        %v372 = vsub.f32 %v370, %v371
        %v373 = vand.u32 %v372, 4294901760
        %374 = vmatpush.msra.mxu0 %v373
        %v375 = vand.u32 %v308, 4294901760
        %376 = vmatmul.f32.gmra.mxu0 %v375
        %v377 = vpop.f32.mrf.mxu0
        %v378 = vadd.f32 %v337, %v377
        %379 = vdwg.mxu0
        %380 = vmatpush.msra.mxu0 0.0
        %381 = vmatpush.msra.mxu0 0.0
        %382 = vmatpush.msra.mxu0 0.0
        %383 = vmatpush.msra.mxu0 0.0
        %384 = vmatpush.msra.mxu0 0.0
        %385 = vmatpush.msra.mxu0 0.0
        %386 = vmatpush.msra.mxu0 0.0
        %387 = vmatpush.msra.mxu0 0.0
        %388 = vmatpush.msra.mxu0 0.0
        %389 = vmatpush.msra.mxu0 0.0
        %390 = vmatpush.msra.mxu0 0.0
        %391 = vmatpush.msra.mxu0 0.0
        %v392 = vand.u32 %v305, 4294901760
        %v393 = vsub.f32 %v305, %v392
        %394 = vmatpush.msra.mxu0 %v393
        %v395 = vand.u32 %v304, 4294901760
        %v396 = vsub.f32 %v304, %v395
        %397 = vmatpush.msra.mxu0 %v396
        %v398 = vand.u32 %v303, 4294901760
        %v399 = vsub.f32 %v303, %v398
        %400 = vmatpush.msra.mxu0 %v399
        %v401 = vand.u32 %v302, 4294901760
        %v402 = vsub.f32 %v302, %v401
        %403 = vmatpush.msra.mxu0 %v402
        %v404 = vand.u32 %v308, 4294901760
        %v405 = vsub.f32 %v308, %v404
        %406 = vmatmul.f32.gmra.mxu0 %v405
        %v407 = vpop.f32.mrf.mxu0
        %v408 = vadd.f32 %v378, %v407
        %409 = vdwg.mxu0
        %410 = vmatpush.msra.mxu0 0.0
        %411 = vmatpush.msra.mxu0 0.0
        %412 = vmatpush.msra.mxu0 0.0
        %413 = vmatpush.msra.mxu0 0.0
        %414 = vmatpush.msra.mxu0 0.0
        %415 = vmatpush.msra.mxu0 0.0
        %416 = vmatpush.msra.mxu0 0.0
        %417 = vmatpush.msra.mxu0 0.0
        %418 = vmatpush.msra.mxu0 0.0
        %419 = vmatpush.msra.mxu0 0.0
        %420 = vmatpush.msra.mxu0 0.0
        %421 = vmatpush.msra.mxu0 0.0
        %v422 = vand.u32 %v305, 4294901760
        %423 = vmatpush.msra.mxu0 %v422
        %v424 = vand.u32 %v304, 4294901760
        %425 = vmatpush.msra.mxu0 %v424
        %v426 = vand.u32 %v303, 4294901760
        %427 = vmatpush.msra.mxu0 %v426
        %v428 = vand.u32 %v302, 4294901760
        %429 = vmatpush.msra.mxu0 %v428
        %v430 = vand.u32 %v308, 4294901760
        %v431 = vsub.f32 %v308, %v430
        %v432 = vand.u32 %v431, 4294901760
        %433 = vmatmul.f32.gmra.mxu0 %v432
        %v434 = vpop.f32.mrf.mxu0
        %v435 = vadd.f32 %v408, %v434
        %436 = vdwg.mxu0
        %437 = vmatpush.msra.mxu0 0.0
        %438 = vmatpush.msra.mxu0 0.0
        %439 = vmatpush.msra.mxu0 0.0
        %440 = vmatpush.msra.mxu0 0.0
        %441 = vmatpush.msra.mxu0 0.0
        %442 = vmatpush.msra.mxu0 0.0
        %443 = vmatpush.msra.mxu0 0.0
        %444 = vmatpush.msra.mxu0 0.0
        %445 = vmatpush.msra.mxu0 0.0
        %446 = vmatpush.msra.mxu0 0.0
        %447 = vmatpush.msra.mxu0 0.0
        %448 = vmatpush.msra.mxu0 0.0
        %v449 = vand.u32 %v305, 4294901760
        %v450 = vsub.f32 %v305, %v449
        %v451 = vand.u32 %v450, 4294901760
        %452 = vmatpush.msra.mxu0 %v451
        %v453 = vand.u32 %v304, 4294901760
        %v454 = vsub.f32 %v304, %v453
        %v455 = vand.u32 %v454, 4294901760
        %456 = vmatpush.msra.mxu0 %v455
        %v457 = vand.u32 %v303, 4294901760
        %v458 = vsub.f32 %v303, %v457
        %v459 = vand.u32 %v458, 4294901760
        %460 = vmatpush.msra.mxu0 %v459
        %v461 = vand.u32 %v302, 4294901760
        %v462 = vsub.f32 %v302, %v461
        %v463 = vand.u32 %v462, 4294901760
        %464 = vmatpush.msra.mxu0 %v463
        %v465 = vand.u32 %v308, 4294901760
        %466 = vmatmul.f32.gmra.mxu0 %v465
        %v467 = vpop.f32.mrf.mxu0
        %v468 = vadd.f32 %v435, %v467
        %469 = vdwg.mxu0
        %470 = vmatpush.msra.mxu0 0.0
        %471 = vmatpush.msra.mxu0 0.0
        %472 = vmatpush.msra.mxu0 0.0
        %473 = vmatpush.msra.mxu0 0.0
        %474 = vmatpush.msra.mxu0 0.0
        %475 = vmatpush.msra.mxu0 0.0
        %476 = vmatpush.msra.mxu0 0.0
        %477 = vmatpush.msra.mxu0 0.0
        %478 = vmatpush.msra.mxu0 0.0
        %479 = vmatpush.msra.mxu0 0.0
        %480 = vmatpush.msra.mxu0 0.0
        %481 = vmatpush.msra.mxu0 0.0
        %v482 = vand.u32 %v305, 4294901760
        %483 = vmatpush.msra.mxu0 %v482
        %v484 = vand.u32 %v304, 4294901760
        %485 = vmatpush.msra.mxu0 %v484
        %v486 = vand.u32 %v303, 4294901760
        %487 = vmatpush.msra.mxu0 %v486
        %v488 = vand.u32 %v302, 4294901760
        %489 = vmatpush.msra.mxu0 %v488
        %v490 = vand.u32 %v308, 4294901760
        %491 = vmatmul.f32.gmra.mxu0 %v490
        %v492 = vpop.f32.mrf.mxu0
        %v493 = vadd.f32 %v468, %v492
        %494 = vdwg.mxu0
        %v495 = vld [vmem:[#allocation7] sm:$0xff]
        %v496 = vld [vmem:[#allocation7 + $0x8] sm:$0xff]
        %v497 = vld [vmem:[#allocation7 + $0x10] sm:$0xff]
        %v498 = vld [vmem:[#allocation7 + $0x18] sm:$0xff]
        %500 = vrot.lane.b32.xlu0 %v493, 96
        %v501 = vpop.permute.xlu0 %500
        %vm502 = vcmask 64512
        %v503 = vsel %vm502, %v493, 0
        %v505 = vsel %vm502, %v501, 0
        %507 = vmatpush.xpose.msra.mxu0 0.0
        %508 = vmatpush.xpose.msra.mxu0 0.0
        %509 = vmatpush.xpose.msra.mxu0 0.0
        %510 = vmatpush.xpose.msra.mxu0 0.0
        %511 = vmatpush.xpose.msra.mxu0 0.0
        %512 = vmatpush.xpose.msra.mxu0 0.0
        %513 = vmatpush.xpose.msra.mxu0 0.0
        %514 = vmatpush.xpose.msra.mxu0 0.0
        %515 = vmatpush.xpose.msra.mxu0 0.0
        %516 = vmatpush.xpose.msra.mxu0 0.0
        %517 = vmatpush.xpose.msra.mxu0 0.0
        %518 = vmatpush.xpose.msra.mxu0 0.0
        %519 = vmatpush.xpose.msra.mxu0 0.0
        %520 = vmatpush.xpose.msra.mxu0 0.0
        %521 = vmatpush.xpose.msra.mxu0 0.0
        %v522 = vand.u32 %v505, 4294901760
        %523 = vmatpush.xpose.msra.mxu0 %v522
        %v524 = vand.u32 %v503, 4294901760
        %v525 = vsub.f32 %v503, %v524
        %v526 = vand.u32 %v525, 4294901760
        %v527 = vsub.f32 %v525, %v526
        %v528 = vand.u32 %v527, 4294901760
        %529 = vmatmul.f32.gmra.mxu0 %v528
        %v530 = vpop.f32.mrf.mxu0
        %v531 = vadd.f32 0.0, %v530
        %532 = vdwg.mxu0
        %533 = vmatpush.xpose.msra.mxu0 0.0
        %534 = vmatpush.xpose.msra.mxu0 0.0
        %535 = vmatpush.xpose.msra.mxu0 0.0
        %536 = vmatpush.xpose.msra.mxu0 0.0
        %537 = vmatpush.xpose.msra.mxu0 0.0
        %538 = vmatpush.xpose.msra.mxu0 0.0
        %539 = vmatpush.xpose.msra.mxu0 0.0
        %540 = vmatpush.xpose.msra.mxu0 0.0
        %541 = vmatpush.xpose.msra.mxu0 0.0
        %542 = vmatpush.xpose.msra.mxu0 0.0
        %543 = vmatpush.xpose.msra.mxu0 0.0
        %544 = vmatpush.xpose.msra.mxu0 0.0
        %545 = vmatpush.xpose.msra.mxu0 0.0
        %546 = vmatpush.xpose.msra.mxu0 0.0
        %547 = vmatpush.xpose.msra.mxu0 0.0
        %v548 = vand.u32 %v505, 4294901760
        %v549 = vsub.f32 %v505, %v548
        %v550 = vand.u32 %v549, 4294901760
        %v551 = vsub.f32 %v549, %v550
        %v552 = vand.u32 %v551, 4294901760
        %553 = vmatpush.xpose.msra.mxu0 %v552
        %v554 = vand.u32 %v503, 4294901760
        %555 = vmatmul.f32.gmra.mxu0 %v554
        %v556 = vpop.f32.mrf.mxu0
        %v557 = vadd.f32 %v531, %v556
        %558 = vdwg.mxu0
        %559 = vmatpush.xpose.msra.mxu0 0.0
        %560 = vmatpush.xpose.msra.mxu0 0.0
        %561 = vmatpush.xpose.msra.mxu0 0.0
        %562 = vmatpush.xpose.msra.mxu0 0.0
        %563 = vmatpush.xpose.msra.mxu0 0.0
        %564 = vmatpush.xpose.msra.mxu0 0.0
        %565 = vmatpush.xpose.msra.mxu0 0.0
        %566 = vmatpush.xpose.msra.mxu0 0.0
        %567 = vmatpush.xpose.msra.mxu0 0.0
        %568 = vmatpush.xpose.msra.mxu0 0.0
        %569 = vmatpush.xpose.msra.mxu0 0.0
        %570 = vmatpush.xpose.msra.mxu0 0.0
        %571 = vmatpush.xpose.msra.mxu0 0.0
        %572 = vmatpush.xpose.msra.mxu0 0.0
        %573 = vmatpush.xpose.msra.mxu0 0.0
        %v574 = vand.u32 %v505, 4294901760
        %v575 = vsub.f32 %v505, %v574
        %576 = vmatpush.xpose.msra.mxu0 %v575
        %v577 = vand.u32 %v503, 4294901760
        %v578 = vsub.f32 %v503, %v577
        %579 = vmatmul.f32.gmra.mxu0 %v578
        %v580 = vpop.f32.mrf.mxu0
        %v581 = vadd.f32 %v557, %v580
        %582 = vdwg.mxu0
        %583 = vmatpush.xpose.msra.mxu0 0.0
        %584 = vmatpush.xpose.msra.mxu0 0.0
        %585 = vmatpush.xpose.msra.mxu0 0.0
        %586 = vmatpush.xpose.msra.mxu0 0.0
        %587 = vmatpush.xpose.msra.mxu0 0.0
        %588 = vmatpush.xpose.msra.mxu0 0.0
        %589 = vmatpush.xpose.msra.mxu0 0.0
        %590 = vmatpush.xpose.msra.mxu0 0.0
        %591 = vmatpush.xpose.msra.mxu0 0.0
        %592 = vmatpush.xpose.msra.mxu0 0.0
        %593 = vmatpush.xpose.msra.mxu0 0.0
        %594 = vmatpush.xpose.msra.mxu0 0.0
        %595 = vmatpush.xpose.msra.mxu0 0.0
        %596 = vmatpush.xpose.msra.mxu0 0.0
        %597 = vmatpush.xpose.msra.mxu0 0.0
        %v598 = vand.u32 %v505, 4294901760
        %599 = vmatpush.xpose.msra.mxu0 %v598
        %v600 = vand.u32 %v503, 4294901760
        %v601 = vsub.f32 %v503, %v600
        %v602 = vand.u32 %v601, 4294901760
        %603 = vmatmul.f32.gmra.mxu0 %v602
        %v604 = vpop.f32.mrf.mxu0
        %v605 = vadd.f32 %v581, %v604
        %606 = vdwg.mxu0
        %607 = vmatpush.xpose.msra.mxu0 0.0
        %608 = vmatpush.xpose.msra.mxu0 0.0
        %609 = vmatpush.xpose.msra.mxu0 0.0
        %610 = vmatpush.xpose.msra.mxu0 0.0
        %611 = vmatpush.xpose.msra.mxu0 0.0
        %612 = vmatpush.xpose.msra.mxu0 0.0
        %613 = vmatpush.xpose.msra.mxu0 0.0
        %614 = vmatpush.xpose.msra.mxu0 0.0
        %615 = vmatpush.xpose.msra.mxu0 0.0
        %616 = vmatpush.xpose.msra.mxu0 0.0
        %617 = vmatpush.xpose.msra.mxu0 0.0
        %618 = vmatpush.xpose.msra.mxu0 0.0
        %619 = vmatpush.xpose.msra.mxu0 0.0
        %620 = vmatpush.xpose.msra.mxu0 0.0
        %621 = vmatpush.xpose.msra.mxu0 0.0
        %v622 = vand.u32 %v505, 4294901760
        %v623 = vsub.f32 %v505, %v622
        %v624 = vand.u32 %v623, 4294901760
        %625 = vmatpush.xpose.msra.mxu0 %v624
        %v626 = vand.u32 %v503, 4294901760
        %627 = vmatmul.f32.gmra.mxu0 %v626
        %v628 = vpop.f32.mrf.mxu0
        %v629 = vadd.f32 %v605, %v628
        %630 = vdwg.mxu0
        %631 = vmatpush.xpose.msra.mxu0 0.0
        %632 = vmatpush.xpose.msra.mxu0 0.0
        %633 = vmatpush.xpose.msra.mxu0 0.0
        %634 = vmatpush.xpose.msra.mxu0 0.0
        %635 = vmatpush.xpose.msra.mxu0 0.0
        %636 = vmatpush.xpose.msra.mxu0 0.0
        %637 = vmatpush.xpose.msra.mxu0 0.0
        %638 = vmatpush.xpose.msra.mxu0 0.0
        %639 = vmatpush.xpose.msra.mxu0 0.0
        %640 = vmatpush.xpose.msra.mxu0 0.0
        %641 = vmatpush.xpose.msra.mxu0 0.0
        %642 = vmatpush.xpose.msra.mxu0 0.0
        %643 = vmatpush.xpose.msra.mxu0 0.0
        %644 = vmatpush.xpose.msra.mxu0 0.0
        %645 = vmatpush.xpose.msra.mxu0 0.0
        %v646 = vand.u32 %v505, 4294901760
        %647 = vmatpush.xpose.msra.mxu0 %v646
        %v648 = vand.u32 %v503, 4294901760
        %649 = vmatmul.f32.gmra.mxu0 %v648
        %v650 = vpop.f32.mrf.mxu0
        %v651 = vadd.f32 %v629, %v650
        %652 = vdwg.mxu0
        %v653 = vmul.f32 %v651, 0.35355338
        %v654 = vsel %vm502, %v653, -inf
        %655 = vmax.xlane.f32.xlu0 %v654
        %v656 = vpop.xlane.xlu0 %655
        %v657 = vsub.f32 %v653, %v656
        %v658 = vmul.f32 %v657, 1.442695
        %v659 = vpow.pop %v658
        %v660 = vsel %vm502, %v659, 0.0
        %661 = vadd.xlane.f32.xlu0 %v660
        %v662 = vpop.xlane.xlu0 %661
        %v663 = vrcp.pop %v662
        %v664 = vmul.f32 %v662, %v663
        %v665 = vsub.f32 2.0, %v664
        %v666 = vmul.f32 %v663, %v665
        %v667 = vmul.f32 %v659, %v666
        %668 = vrot.lane.b32.xlu0 %v493, 64
        %v669 = vpop.permute.xlu0 %668
        %v672 = vsel %vm502, %v667, 0
        %674 = vmatpush.msra.mxu0 0.0
        %675 = vmatpush.msra.mxu0 0.0
        %676 = vmatpush.msra.mxu0 0.0
        %677 = vmatpush.msra.mxu0 0.0
        %678 = vmatpush.msra.mxu0 0.0
        %679 = vmatpush.msra.mxu0 0.0
        %680 = vmatpush.msra.mxu0 0.0
        %681 = vmatpush.msra.mxu0 0.0
        %682 = vmatpush.msra.mxu0 0.0
        %683 = vmatpush.msra.mxu0 0.0
        %684 = vmatpush.msra.mxu0 0.0
        %685 = vmatpush.msra.mxu0 0.0
        %686 = vmatpush.msra.mxu0 0.0
        %687 = vmatpush.msra.mxu0 0.0
        %688 = vmatpush.msra.mxu0 0.0
        %v689 = vand.u32 %v669, 4294901760
        %690 = vmatpush.msra.mxu0 %v689
        %v691 = vand.u32 %v672, 4294901760
        %v692 = vsub.f32 %v672, %v691
        %v693 = vand.u32 %v692, 4294901760
        %v694 = vsub.f32 %v692, %v693
        %v695 = vand.u32 %v694, 4294901760
        %696 = vmatmul.f32.gmra.mxu0 %v695
        %v697 = vpop.f32.mrf.mxu0
        %v698 = vadd.f32 0.0, %v697
        %699 = vdwg.mxu0
        %700 = vmatpush.msra.mxu0 0.0
        %701 = vmatpush.msra.mxu0 0.0
        %702 = vmatpush.msra.mxu0 0.0
        %703 = vmatpush.msra.mxu0 0.0
        %704 = vmatpush.msra.mxu0 0.0
        %705 = vmatpush.msra.mxu0 0.0
        %706 = vmatpush.msra.mxu0 0.0
        %707 = vmatpush.msra.mxu0 0.0
        %708 = vmatpush.msra.mxu0 0.0
        %709 = vmatpush.msra.mxu0 0.0
        %710 = vmatpush.msra.mxu0 0.0
        %711 = vmatpush.msra.mxu0 0.0
        %712 = vmatpush.msra.mxu0 0.0
        %713 = vmatpush.msra.mxu0 0.0
        %714 = vmatpush.msra.mxu0 0.0
        %v715 = vand.u32 %v669, 4294901760
        %v716 = vsub.f32 %v669, %v715
        %v717 = vand.u32 %v716, 4294901760
        %v718 = vsub.f32 %v716, %v717
        %v719 = vand.u32 %v718, 4294901760
        %720 = vmatpush.msra.mxu0 %v719
        %v721 = vand.u32 %v672, 4294901760
        %722 = vmatmul.f32.gmra.mxu0 %v721
        %v723 = vpop.f32.mrf.mxu0
        %v724 = vadd.f32 %v698, %v723
        %725 = vdwg.mxu0
        %726 = vmatpush.msra.mxu0 0.0
        %727 = vmatpush.msra.mxu0 0.0
        %728 = vmatpush.msra.mxu0 0.0
        %729 = vmatpush.msra.mxu0 0.0
        %730 = vmatpush.msra.mxu0 0.0
        %731 = vmatpush.msra.mxu0 0.0
        %732 = vmatpush.msra.mxu0 0.0
        %733 = vmatpush.msra.mxu0 0.0
        %734 = vmatpush.msra.mxu0 0.0
        %735 = vmatpush.msra.mxu0 0.0
        %736 = vmatpush.msra.mxu0 0.0
        %737 = vmatpush.msra.mxu0 0.0
        %738 = vmatpush.msra.mxu0 0.0
        %739 = vmatpush.msra.mxu0 0.0
        %740 = vmatpush.msra.mxu0 0.0
        %v741 = vand.u32 %v669, 4294901760
        %v742 = vsub.f32 %v669, %v741
        %743 = vmatpush.msra.mxu0 %v742
        %v744 = vand.u32 %v672, 4294901760
        %v745 = vsub.f32 %v672, %v744
        %746 = vmatmul.f32.gmra.mxu0 %v745
        %v747 = vpop.f32.mrf.mxu0
        %v748 = vadd.f32 %v724, %v747
        %749 = vdwg.mxu0
        %750 = vmatpush.msra.mxu0 0.0
        %751 = vmatpush.msra.mxu0 0.0
        %752 = vmatpush.msra.mxu0 0.0
        %753 = vmatpush.msra.mxu0 0.0
        %754 = vmatpush.msra.mxu0 0.0
        %755 = vmatpush.msra.mxu0 0.0
        %756 = vmatpush.msra.mxu0 0.0
        %757 = vmatpush.msra.mxu0 0.0
        %758 = vmatpush.msra.mxu0 0.0
        %759 = vmatpush.msra.mxu0 0.0
        %760 = vmatpush.msra.mxu0 0.0
        %761 = vmatpush.msra.mxu0 0.0
        %762 = vmatpush.msra.mxu0 0.0
        %763 = vmatpush.msra.mxu0 0.0
        %764 = vmatpush.msra.mxu0 0.0
        %v765 = vand.u32 %v669, 4294901760
        %766 = vmatpush.msra.mxu0 %v765
        %v767 = vand.u32 %v672, 4294901760
        %v768 = vsub.f32 %v672, %v767
        %v769 = vand.u32 %v768, 4294901760
        %770 = vmatmul.f32.gmra.mxu0 %v769
        %v771 = vpop.f32.mrf.mxu0
        %v772 = vadd.f32 %v748, %v771
        %773 = vdwg.mxu0
        %774 = vmatpush.msra.mxu0 0.0
        %775 = vmatpush.msra.mxu0 0.0
        %776 = vmatpush.msra.mxu0 0.0
        %777 = vmatpush.msra.mxu0 0.0
        %778 = vmatpush.msra.mxu0 0.0
        %779 = vmatpush.msra.mxu0 0.0
        %780 = vmatpush.msra.mxu0 0.0
        %781 = vmatpush.msra.mxu0 0.0
        %782 = vmatpush.msra.mxu0 0.0
        %783 = vmatpush.msra.mxu0 0.0
        %784 = vmatpush.msra.mxu0 0.0
        %785 = vmatpush.msra.mxu0 0.0
        %786 = vmatpush.msra.mxu0 0.0
        %787 = vmatpush.msra.mxu0 0.0
        %788 = vmatpush.msra.mxu0 0.0
        %v789 = vand.u32 %v669, 4294901760
        %v790 = vsub.f32 %v669, %v789
        %v791 = vand.u32 %v790, 4294901760
        %792 = vmatpush.msra.mxu0 %v791
        %v793 = vand.u32 %v672, 4294901760
        %794 = vmatmul.f32.gmra.mxu0 %v793
        %v795 = vpop.f32.mrf.mxu0
        %v796 = vadd.f32 %v772, %v795
        %797 = vdwg.mxu0
        %798 = vmatpush.msra.mxu0 0.0
        %799 = vmatpush.msra.mxu0 0.0
        %800 = vmatpush.msra.mxu0 0.0
        %801 = vmatpush.msra.mxu0 0.0
        %802 = vmatpush.msra.mxu0 0.0
        %803 = vmatpush.msra.mxu0 0.0
        %804 = vmatpush.msra.mxu0 0.0
        %805 = vmatpush.msra.mxu0 0.0
        %806 = vmatpush.msra.mxu0 0.0
        %807 = vmatpush.msra.mxu0 0.0
        %808 = vmatpush.msra.mxu0 0.0
        %809 = vmatpush.msra.mxu0 0.0
        %810 = vmatpush.msra.mxu0 0.0
        %811 = vmatpush.msra.mxu0 0.0
        %812 = vmatpush.msra.mxu0 0.0
        %v813 = vand.u32 %v669, 4294901760
        %814 = vmatpush.msra.mxu0 %v813
        %v815 = vand.u32 %v672, 4294901760
        %816 = vmatmul.f32.gmra.mxu0 %v815
        %v817 = vpop.f32.mrf.mxu0
        %v818 = vadd.f32 %v796, %v817
        %819 = vdwg.mxu0
        %820 = vrot.lane.b32.xlu0 %v493, 120
        %v821 = vpop.permute.xlu0 %820
        %822 = vrot.lane.b32.xlu0 %v493, 88
        %v823 = vpop.permute.xlu0 %822
        %v824 = vsel %vm502, %v821, 0
        %v826 = vsel %vm502, %v823, 0
        %828 = vmatpush.xpose.msra.mxu0 0.0
        %829 = vmatpush.xpose.msra.mxu0 0.0
        %830 = vmatpush.xpose.msra.mxu0 0.0
        %831 = vmatpush.xpose.msra.mxu0 0.0
        %832 = vmatpush.xpose.msra.mxu0 0.0
        %833 = vmatpush.xpose.msra.mxu0 0.0
        %834 = vmatpush.xpose.msra.mxu0 0.0
        %835 = vmatpush.xpose.msra.mxu0 0.0
        %836 = vmatpush.xpose.msra.mxu0 0.0
        %837 = vmatpush.xpose.msra.mxu0 0.0
        %838 = vmatpush.xpose.msra.mxu0 0.0
        %839 = vmatpush.xpose.msra.mxu0 0.0
        %840 = vmatpush.xpose.msra.mxu0 0.0
        %841 = vmatpush.xpose.msra.mxu0 0.0
        %842 = vmatpush.xpose.msra.mxu0 0.0
        %v843 = vand.u32 %v826, 4294901760
        %844 = vmatpush.xpose.msra.mxu0 %v843
        %v845 = vand.u32 %v824, 4294901760
        %v846 = vsub.f32 %v824, %v845
        %v847 = vand.u32 %v846, 4294901760
        %v848 = vsub.f32 %v846, %v847
        %v849 = vand.u32 %v848, 4294901760
        %850 = vmatmul.f32.gmra.mxu0 %v849
        %v851 = vpop.f32.mrf.mxu0
        %v852 = vadd.f32 0.0, %v851
        %853 = vdwg.mxu0
        %854 = vmatpush.xpose.msra.mxu0 0.0
        %855 = vmatpush.xpose.msra.mxu0 0.0
        %856 = vmatpush.xpose.msra.mxu0 0.0
        %857 = vmatpush.xpose.msra.mxu0 0.0
        %858 = vmatpush.xpose.msra.mxu0 0.0
        %859 = vmatpush.xpose.msra.mxu0 0.0
        %860 = vmatpush.xpose.msra.mxu0 0.0
        %861 = vmatpush.xpose.msra.mxu0 0.0
        %862 = vmatpush.xpose.msra.mxu0 0.0
        %863 = vmatpush.xpose.msra.mxu0 0.0
        %864 = vmatpush.xpose.msra.mxu0 0.0
        %865 = vmatpush.xpose.msra.mxu0 0.0
        %866 = vmatpush.xpose.msra.mxu0 0.0
        %867 = vmatpush.xpose.msra.mxu0 0.0
        %868 = vmatpush.xpose.msra.mxu0 0.0
        %v869 = vand.u32 %v826, 4294901760
        %v870 = vsub.f32 %v826, %v869
        %v871 = vand.u32 %v870, 4294901760
        %v872 = vsub.f32 %v870, %v871
        %v873 = vand.u32 %v872, 4294901760
        %874 = vmatpush.xpose.msra.mxu0 %v873
        %v875 = vand.u32 %v824, 4294901760
        %876 = vmatmul.f32.gmra.mxu0 %v875
        %v877 = vpop.f32.mrf.mxu0
        %v878 = vadd.f32 %v852, %v877
        %879 = vdwg.mxu0
        %880 = vmatpush.xpose.msra.mxu0 0.0
        %881 = vmatpush.xpose.msra.mxu0 0.0
        %882 = vmatpush.xpose.msra.mxu0 0.0
        %883 = vmatpush.xpose.msra.mxu0 0.0
        %884 = vmatpush.xpose.msra.mxu0 0.0
        %885 = vmatpush.xpose.msra.mxu0 0.0
        %886 = vmatpush.xpose.msra.mxu0 0.0
        %887 = vmatpush.xpose.msra.mxu0 0.0
        %888 = vmatpush.xpose.msra.mxu0 0.0
        %889 = vmatpush.xpose.msra.mxu0 0.0
        %890 = vmatpush.xpose.msra.mxu0 0.0
        %891 = vmatpush.xpose.msra.mxu0 0.0
        %892 = vmatpush.xpose.msra.mxu0 0.0
        %893 = vmatpush.xpose.msra.mxu0 0.0
        %894 = vmatpush.xpose.msra.mxu0 0.0
        %v895 = vand.u32 %v826, 4294901760
        %v896 = vsub.f32 %v826, %v895
        %897 = vmatpush.xpose.msra.mxu0 %v896
        %v898 = vand.u32 %v824, 4294901760
        %v899 = vsub.f32 %v824, %v898
        %900 = vmatmul.f32.gmra.mxu0 %v899
        %v901 = vpop.f32.mrf.mxu0
        %v902 = vadd.f32 %v878, %v901
        %903 = vdwg.mxu0
        %904 = vmatpush.xpose.msra.mxu0 0.0
        %905 = vmatpush.xpose.msra.mxu0 0.0
        %906 = vmatpush.xpose.msra.mxu0 0.0
        %907 = vmatpush.xpose.msra.mxu0 0.0
        %908 = vmatpush.xpose.msra.mxu0 0.0
        %909 = vmatpush.xpose.msra.mxu0 0.0
        %910 = vmatpush.xpose.msra.mxu0 0.0
        %911 = vmatpush.xpose.msra.mxu0 0.0
        %912 = vmatpush.xpose.msra.mxu0 0.0
        %913 = vmatpush.xpose.msra.mxu0 0.0
        %914 = vmatpush.xpose.msra.mxu0 0.0
        %915 = vmatpush.xpose.msra.mxu0 0.0
        %916 = vmatpush.xpose.msra.mxu0 0.0
        %917 = vmatpush.xpose.msra.mxu0 0.0
        %918 = vmatpush.xpose.msra.mxu0 0.0
        %v919 = vand.u32 %v826, 4294901760
        %920 = vmatpush.xpose.msra.mxu0 %v919
        %v921 = vand.u32 %v824, 4294901760
        %v922 = vsub.f32 %v824, %v921
        %v923 = vand.u32 %v922, 4294901760
        %924 = vmatmul.f32.gmra.mxu0 %v923
        %v925 = vpop.f32.mrf.mxu0
        %v926 = vadd.f32 %v902, %v925
        %927 = vdwg.mxu0
        %928 = vmatpush.xpose.msra.mxu0 0.0
        %929 = vmatpush.xpose.msra.mxu0 0.0
        %930 = vmatpush.xpose.msra.mxu0 0.0
        %931 = vmatpush.xpose.msra.mxu0 0.0
        %932 = vmatpush.xpose.msra.mxu0 0.0
        %933 = vmatpush.xpose.msra.mxu0 0.0
        %934 = vmatpush.xpose.msra.mxu0 0.0
        %935 = vmatpush.xpose.msra.mxu0 0.0
        %936 = vmatpush.xpose.msra.mxu0 0.0
        %937 = vmatpush.xpose.msra.mxu0 0.0
        %938 = vmatpush.xpose.msra.mxu0 0.0
        %939 = vmatpush.xpose.msra.mxu0 0.0
        %940 = vmatpush.xpose.msra.mxu0 0.0
        %941 = vmatpush.xpose.msra.mxu0 0.0
        %942 = vmatpush.xpose.msra.mxu0 0.0
        %v943 = vand.u32 %v826, 4294901760
        %v944 = vsub.f32 %v826, %v943
        %v945 = vand.u32 %v944, 4294901760
        %946 = vmatpush.xpose.msra.mxu0 %v945
        %v947 = vand.u32 %v824, 4294901760
        %948 = vmatmul.f32.gmra.mxu0 %v947
        %v949 = vpop.f32.mrf.mxu0
        %v950 = vadd.f32 %v926, %v949
        %951 = vdwg.mxu0
        %952 = vmatpush.xpose.msra.mxu0 0.0
        %953 = vmatpush.xpose.msra.mxu0 0.0
        %954 = vmatpush.xpose.msra.mxu0 0.0
        %955 = vmatpush.xpose.msra.mxu0 0.0
        %956 = vmatpush.xpose.msra.mxu0 0.0
        %957 = vmatpush.xpose.msra.mxu0 0.0
        %958 = vmatpush.xpose.msra.mxu0 0.0
        %959 = vmatpush.xpose.msra.mxu0 0.0
        %960 = vmatpush.xpose.msra.mxu0 0.0
        %961 = vmatpush.xpose.msra.mxu0 0.0
        %962 = vmatpush.xpose.msra.mxu0 0.0
        %963 = vmatpush.xpose.msra.mxu0 0.0
        %964 = vmatpush.xpose.msra.mxu0 0.0
        %965 = vmatpush.xpose.msra.mxu0 0.0
        %966 = vmatpush.xpose.msra.mxu0 0.0
        %v967 = vand.u32 %v826, 4294901760
        %968 = vmatpush.xpose.msra.mxu0 %v967
        %v969 = vand.u32 %v824, 4294901760
        %970 = vmatmul.f32.gmra.mxu0 %v969
        %v971 = vpop.f32.mrf.mxu0
        %v972 = vadd.f32 %v950, %v971
        %973 = vdwg.mxu0
        %v974 = vmul.f32 %v972, 0.35355338
        %v975 = vsel %vm502, %v974, -inf
        %976 = vmax.xlane.f32.xlu0 %v975
        %v977 = vpop.xlane.xlu0 %976
        %v978 = vsub.f32 %v974, %v977
        %v979 = vmul.f32 %v978, 1.442695
        %v980 = vpow.pop %v979
        %v981 = vsel %vm502, %v980, 0.0
        %982 = vadd.xlane.f32.xlu0 %v981
        %v983 = vpop.xlane.xlu0 %982
        %v984 = vrcp.pop %v983
        %v985 = vmul.f32 %v983, %v984
        %v986 = vsub.f32 2.0, %v985
        %v987 = vmul.f32 %v984, %v986
        %v988 = vmul.f32 %v980, %v987
        %989 = vrot.lane.b32.xlu0 %v493, 56
        %v990 = vpop.permute.xlu0 %989
        %v993 = vsel %vm502, %v988, 0
        %995 = vmatpush.msra.mxu0 0.0
        %996 = vmatpush.msra.mxu0 0.0
        %997 = vmatpush.msra.mxu0 0.0
        %998 = vmatpush.msra.mxu0 0.0
        %999 = vmatpush.msra.mxu0 0.0
        %1000 = vmatpush.msra.mxu0 0.0
        %1001 = vmatpush.msra.mxu0 0.0
        %1002 = vmatpush.msra.mxu0 0.0
        %1003 = vmatpush.msra.mxu0 0.0
        %1004 = vmatpush.msra.mxu0 0.0
        %1005 = vmatpush.msra.mxu0 0.0
        %1006 = vmatpush.msra.mxu0 0.0
        %1007 = vmatpush.msra.mxu0 0.0
        %1008 = vmatpush.msra.mxu0 0.0
        %1009 = vmatpush.msra.mxu0 0.0
        %v1010 = vand.u32 %v990, 4294901760
        %1011 = vmatpush.msra.mxu0 %v1010
        %v1012 = vand.u32 %v993, 4294901760
        %v1013 = vsub.f32 %v993, %v1012
        %v1014 = vand.u32 %v1013, 4294901760
        %v1015 = vsub.f32 %v1013, %v1014
        %v1016 = vand.u32 %v1015, 4294901760
        %1017 = vmatmul.f32.gmra.mxu0 %v1016
        %v1018 = vpop.f32.mrf.mxu0
        %v1019 = vadd.f32 0.0, %v1018
        %1020 = vdwg.mxu0
        %1021 = vmatpush.msra.mxu0 0.0
        %1022 = vmatpush.msra.mxu0 0.0
        %1023 = vmatpush.msra.mxu0 0.0
        %1024 = vmatpush.msra.mxu0 0.0
        %1025 = vmatpush.msra.mxu0 0.0
        %1026 = vmatpush.msra.mxu0 0.0
        %1027 = vmatpush.msra.mxu0 0.0
        %1028 = vmatpush.msra.mxu0 0.0
        %1029 = vmatpush.msra.mxu0 0.0
        %1030 = vmatpush.msra.mxu0 0.0
        %1031 = vmatpush.msra.mxu0 0.0
        %1032 = vmatpush.msra.mxu0 0.0
        %1033 = vmatpush.msra.mxu0 0.0
        %1034 = vmatpush.msra.mxu0 0.0
        %1035 = vmatpush.msra.mxu0 0.0
        %v1036 = vand.u32 %v990, 4294901760
        %v1037 = vsub.f32 %v990, %v1036
        %v1038 = vand.u32 %v1037, 4294901760
        %v1039 = vsub.f32 %v1037, %v1038
        %v1040 = vand.u32 %v1039, 4294901760
        %1041 = vmatpush.msra.mxu0 %v1040
        %v1042 = vand.u32 %v993, 4294901760
        %1043 = vmatmul.f32.gmra.mxu0 %v1042
        %v1044 = vpop.f32.mrf.mxu0
        %v1045 = vadd.f32 %v1019, %v1044
        %1046 = vdwg.mxu0
        %1047 = vmatpush.msra.mxu0 0.0
        %1048 = vmatpush.msra.mxu0 0.0
        %1049 = vmatpush.msra.mxu0 0.0
        %1050 = vmatpush.msra.mxu0 0.0
        %1051 = vmatpush.msra.mxu0 0.0
        %1052 = vmatpush.msra.mxu0 0.0
        %1053 = vmatpush.msra.mxu0 0.0
        %1054 = vmatpush.msra.mxu0 0.0
        %1055 = vmatpush.msra.mxu0 0.0
        %1056 = vmatpush.msra.mxu0 0.0
        %1057 = vmatpush.msra.mxu0 0.0
        %1058 = vmatpush.msra.mxu0 0.0
        %1059 = vmatpush.msra.mxu0 0.0
        %1060 = vmatpush.msra.mxu0 0.0
        %1061 = vmatpush.msra.mxu0 0.0
        %v1062 = vand.u32 %v990, 4294901760
        %v1063 = vsub.f32 %v990, %v1062
        %1064 = vmatpush.msra.mxu0 %v1063
        %v1065 = vand.u32 %v993, 4294901760
        %v1066 = vsub.f32 %v993, %v1065
        %1067 = vmatmul.f32.gmra.mxu0 %v1066
        %v1068 = vpop.f32.mrf.mxu0
        %v1069 = vadd.f32 %v1045, %v1068
        %1070 = vdwg.mxu0
        %1071 = vmatpush.msra.mxu0 0.0
        %1072 = vmatpush.msra.mxu0 0.0
        %1073 = vmatpush.msra.mxu0 0.0
        %1074 = vmatpush.msra.mxu0 0.0
        %1075 = vmatpush.msra.mxu0 0.0
        %1076 = vmatpush.msra.mxu0 0.0
        %1077 = vmatpush.msra.mxu0 0.0
        %1078 = vmatpush.msra.mxu0 0.0
        %1079 = vmatpush.msra.mxu0 0.0
        %1080 = vmatpush.msra.mxu0 0.0
        %1081 = vmatpush.msra.mxu0 0.0
        %1082 = vmatpush.msra.mxu0 0.0
        %1083 = vmatpush.msra.mxu0 0.0
        %1084 = vmatpush.msra.mxu0 0.0
        %1085 = vmatpush.msra.mxu0 0.0
        %v1086 = vand.u32 %v990, 4294901760
        %1087 = vmatpush.msra.mxu0 %v1086
        %v1088 = vand.u32 %v993, 4294901760
        %v1089 = vsub.f32 %v993, %v1088
        %v1090 = vand.u32 %v1089, 4294901760
        %1091 = vmatmul.f32.gmra.mxu0 %v1090
        %v1092 = vpop.f32.mrf.mxu0
        %v1093 = vadd.f32 %v1069, %v1092
        %1094 = vdwg.mxu0
        %1095 = vmatpush.msra.mxu0 0.0
        %1096 = vmatpush.msra.mxu0 0.0
        %1097 = vmatpush.msra.mxu0 0.0
        %1098 = vmatpush.msra.mxu0 0.0
        %1099 = vmatpush.msra.mxu0 0.0
        %1100 = vmatpush.msra.mxu0 0.0
        %1101 = vmatpush.msra.mxu0 0.0
        %1102 = vmatpush.msra.mxu0 0.0
        %1103 = vmatpush.msra.mxu0 0.0
        %1104 = vmatpush.msra.mxu0 0.0
        %1105 = vmatpush.msra.mxu0 0.0
        %1106 = vmatpush.msra.mxu0 0.0
        %1107 = vmatpush.msra.mxu0 0.0
        %1108 = vmatpush.msra.mxu0 0.0
        %1109 = vmatpush.msra.mxu0 0.0
        %v1110 = vand.u32 %v990, 4294901760
        %v1111 = vsub.f32 %v990, %v1110
        %v1112 = vand.u32 %v1111, 4294901760
        %1113 = vmatpush.msra.mxu0 %v1112
        %v1114 = vand.u32 %v993, 4294901760
        %1115 = vmatmul.f32.gmra.mxu0 %v1114
        %v1116 = vpop.f32.mrf.mxu0
        %v1117 = vadd.f32 %v1093, %v1116
        %1118 = vdwg.mxu0
        %1119 = vmatpush.msra.mxu0 0.0
        %1120 = vmatpush.msra.mxu0 0.0
        %1121 = vmatpush.msra.mxu0 0.0
        %1122 = vmatpush.msra.mxu0 0.0
        %1123 = vmatpush.msra.mxu0 0.0
        %1124 = vmatpush.msra.mxu0 0.0
        %1125 = vmatpush.msra.mxu0 0.0
        %1126 = vmatpush.msra.mxu0 0.0
        %1127 = vmatpush.msra.mxu0 0.0
        %1128 = vmatpush.msra.mxu0 0.0
        %1129 = vmatpush.msra.mxu0 0.0
        %1130 = vmatpush.msra.mxu0 0.0
        %1131 = vmatpush.msra.mxu0 0.0
        %1132 = vmatpush.msra.mxu0 0.0
        %1133 = vmatpush.msra.mxu0 0.0
        %v1134 = vand.u32 %v990, 4294901760
        %1135 = vmatpush.msra.mxu0 %v1134
        %v1136 = vand.u32 %v993, 4294901760
        %1137 = vmatmul.f32.gmra.mxu0 %v1136
        %v1138 = vpop.f32.mrf.mxu0
        %v1139 = vadd.f32 %v1117, %v1138
        %1140 = vdwg.mxu0
        %v1142 = vsel %vm502, %v1139, 0
        %1144 = vmatpush.msra.mxu0 0.0
        %1145 = vmatpush.msra.mxu0 0.0
        %1146 = vmatpush.msra.mxu0 0.0
        %1147 = vmatpush.msra.mxu0 0.0
        %1148 = vmatpush.msra.mxu0 0.0
        %1149 = vmatpush.msra.mxu0 0.0
        %1150 = vmatpush.msra.mxu0 0.0
        %1151 = vmatpush.msra.mxu0 0.0
        %1152 = vmatpush.msra.mxu0 0.0
        %1153 = vmatpush.msra.mxu0 0.0
        %1154 = vmatpush.msra.mxu0 0.0
        %1155 = vmatpush.msra.mxu0 0.0
        %1156 = vmatpush.msra.mxu0 0.0
        %1157 = vmatpush.msra.mxu0 0.0
        %1158 = vmatpush.msra.mxu0 0.0
        %v1159 = vand.u32 %v496, 4294901760
        %1160 = vmatpush.msra.mxu0 %v1159
        %v1161 = vand.u32 %v1142, 4294901760
        %v1162 = vsub.f32 %v1142, %v1161
        %v1163 = vand.u32 %v1162, 4294901760
        %v1164 = vsub.f32 %v1162, %v1163
        %v1165 = vand.u32 %v1164, 4294901760
        %1166 = vmatmul.f32.gmra.mxu0 %v1165
        %v1167 = vpop.f32.mrf.mxu0
        %v1168 = vadd.f32 0.0, %v1167
        %1169 = vdwg.mxu0
        %1170 = vmatpush.msra.mxu0 0.0
        %1171 = vmatpush.msra.mxu0 0.0
        %1172 = vmatpush.msra.mxu0 0.0
        %1173 = vmatpush.msra.mxu0 0.0
        %1174 = vmatpush.msra.mxu0 0.0
        %1175 = vmatpush.msra.mxu0 0.0
        %1176 = vmatpush.msra.mxu0 0.0
        %1177 = vmatpush.msra.mxu0 0.0
        %1178 = vmatpush.msra.mxu0 0.0
        %1179 = vmatpush.msra.mxu0 0.0
        %1180 = vmatpush.msra.mxu0 0.0
        %1181 = vmatpush.msra.mxu0 0.0
        %1182 = vmatpush.msra.mxu0 0.0
        %1183 = vmatpush.msra.mxu0 0.0
        %1184 = vmatpush.msra.mxu0 0.0
        %v1185 = vand.u32 %v496, 4294901760
        %v1186 = vsub.f32 %v496, %v1185
        %v1187 = vand.u32 %v1186, 4294901760
        %v1188 = vsub.f32 %v1186, %v1187
        %v1189 = vand.u32 %v1188, 4294901760
        %1190 = vmatpush.msra.mxu0 %v1189
        %v1191 = vand.u32 %v1142, 4294901760
        %1192 = vmatmul.f32.gmra.mxu0 %v1191
        %v1193 = vpop.f32.mrf.mxu0
        %v1194 = vadd.f32 %v1168, %v1193
        %1195 = vdwg.mxu0
        %1196 = vmatpush.msra.mxu0 0.0
        %1197 = vmatpush.msra.mxu0 0.0
        %1198 = vmatpush.msra.mxu0 0.0
        %1199 = vmatpush.msra.mxu0 0.0
        %1200 = vmatpush.msra.mxu0 0.0
        %1201 = vmatpush.msra.mxu0 0.0
        %1202 = vmatpush.msra.mxu0 0.0
        %1203 = vmatpush.msra.mxu0 0.0
        %1204 = vmatpush.msra.mxu0 0.0
        %1205 = vmatpush.msra.mxu0 0.0
        %1206 = vmatpush.msra.mxu0 0.0
        %1207 = vmatpush.msra.mxu0 0.0
        %1208 = vmatpush.msra.mxu0 0.0
        %1209 = vmatpush.msra.mxu0 0.0
        %1210 = vmatpush.msra.mxu0 0.0
        %v1211 = vand.u32 %v496, 4294901760
        %v1212 = vsub.f32 %v496, %v1211
        %1213 = vmatpush.msra.mxu0 %v1212
        %v1214 = vand.u32 %v1142, 4294901760
        %v1215 = vsub.f32 %v1142, %v1214
        %1216 = vmatmul.f32.gmra.mxu0 %v1215
        %v1217 = vpop.f32.mrf.mxu0
        %v1218 = vadd.f32 %v1194, %v1217
        %1219 = vdwg.mxu0
        %1220 = vmatpush.msra.mxu0 0.0
        %1221 = vmatpush.msra.mxu0 0.0
        %1222 = vmatpush.msra.mxu0 0.0
        %1223 = vmatpush.msra.mxu0 0.0
        %1224 = vmatpush.msra.mxu0 0.0
        %1225 = vmatpush.msra.mxu0 0.0
        %1226 = vmatpush.msra.mxu0 0.0
        %1227 = vmatpush.msra.mxu0 0.0
        %1228 = vmatpush.msra.mxu0 0.0
        %1229 = vmatpush.msra.mxu0 0.0
        %1230 = vmatpush.msra.mxu0 0.0
        %1231 = vmatpush.msra.mxu0 0.0
        %1232 = vmatpush.msra.mxu0 0.0
        %1233 = vmatpush.msra.mxu0 0.0
        %1234 = vmatpush.msra.mxu0 0.0
        %v1235 = vand.u32 %v496, 4294901760
        %1236 = vmatpush.msra.mxu0 %v1235
        %v1237 = vand.u32 %v1142, 4294901760
        %v1238 = vsub.f32 %v1142, %v1237
        %v1239 = vand.u32 %v1238, 4294901760
        %1240 = vmatmul.f32.gmra.mxu0 %v1239
        %v1241 = vpop.f32.mrf.mxu0
        %v1242 = vadd.f32 %v1218, %v1241
        %1243 = vdwg.mxu0
        %1244 = vmatpush.msra.mxu0 0.0
        %1245 = vmatpush.msra.mxu0 0.0
        %1246 = vmatpush.msra.mxu0 0.0
        %1247 = vmatpush.msra.mxu0 0.0
        %1248 = vmatpush.msra.mxu0 0.0
        %1249 = vmatpush.msra.mxu0 0.0
        %1250 = vmatpush.msra.mxu0 0.0
        %1251 = vmatpush.msra.mxu0 0.0
        %1252 = vmatpush.msra.mxu0 0.0
        %1253 = vmatpush.msra.mxu0 0.0
        %1254 = vmatpush.msra.mxu0 0.0
        %1255 = vmatpush.msra.mxu0 0.0
        %1256 = vmatpush.msra.mxu0 0.0
        %1257 = vmatpush.msra.mxu0 0.0
        %1258 = vmatpush.msra.mxu0 0.0
        %v1259 = vand.u32 %v496, 4294901760
        %v1260 = vsub.f32 %v496, %v1259
        %v1261 = vand.u32 %v1260, 4294901760
        %1262 = vmatpush.msra.mxu0 %v1261
        %v1263 = vand.u32 %v1142, 4294901760
        %1264 = vmatmul.f32.gmra.mxu0 %v1263
        %v1265 = vpop.f32.mrf.mxu0
        %v1266 = vadd.f32 %v1242, %v1265
        %1267 = vdwg.mxu0
        %1268 = vmatpush.msra.mxu0 0.0
        %1269 = vmatpush.msra.mxu0 0.0
        %1270 = vmatpush.msra.mxu0 0.0
        %1271 = vmatpush.msra.mxu0 0.0
        %1272 = vmatpush.msra.mxu0 0.0
        %1273 = vmatpush.msra.mxu0 0.0
        %1274 = vmatpush.msra.mxu0 0.0
        %1275 = vmatpush.msra.mxu0 0.0
        %1276 = vmatpush.msra.mxu0 0.0
        %1277 = vmatpush.msra.mxu0 0.0
        %1278 = vmatpush.msra.mxu0 0.0
        %1279 = vmatpush.msra.mxu0 0.0
        %1280 = vmatpush.msra.mxu0 0.0
        %1281 = vmatpush.msra.mxu0 0.0
        %1282 = vmatpush.msra.mxu0 0.0
        %v1283 = vand.u32 %v496, 4294901760
        %1284 = vmatpush.msra.mxu0 %v1283
        %v1285 = vand.u32 %v1142, 4294901760
        %1286 = vmatmul.f32.gmra.mxu0 %v1285
        %v1287 = vpop.f32.mrf.mxu0
        %v1288 = vadd.f32 %v1266, %v1287
        %1289 = vdwg.mxu0
        %v1291 = vsel %vm502, %v818, 0
        %1293 = vmatpush.msra.mxu0 0.0
        %1294 = vmatpush.msra.mxu0 0.0
        %1295 = vmatpush.msra.mxu0 0.0
        %1296 = vmatpush.msra.mxu0 0.0
        %1297 = vmatpush.msra.mxu0 0.0
        %1298 = vmatpush.msra.mxu0 0.0
        %1299 = vmatpush.msra.mxu0 0.0
        %1300 = vmatpush.msra.mxu0 0.0
        %1301 = vmatpush.msra.mxu0 0.0
        %1302 = vmatpush.msra.mxu0 0.0
        %1303 = vmatpush.msra.mxu0 0.0
        %1304 = vmatpush.msra.mxu0 0.0
        %1305 = vmatpush.msra.mxu0 0.0
        %1306 = vmatpush.msra.mxu0 0.0
        %1307 = vmatpush.msra.mxu0 0.0
        %v1308 = vand.u32 %v495, 4294901760
        %1309 = vmatpush.msra.mxu0 %v1308
        %v1310 = vand.u32 %v1291, 4294901760
        %v1311 = vsub.f32 %v1291, %v1310
        %v1312 = vand.u32 %v1311, 4294901760
        %v1313 = vsub.f32 %v1311, %v1312
        %v1314 = vand.u32 %v1313, 4294901760
        %1315 = vmatmul.f32.gmra.mxu0 %v1314
        %v1316 = vpop.f32.mrf.mxu0
        %v1317 = vadd.f32 %v1288, %v1316
        %1318 = vdwg.mxu0
        %1319 = vmatpush.msra.mxu0 0.0
        %1320 = vmatpush.msra.mxu0 0.0
        %1321 = vmatpush.msra.mxu0 0.0
        %1322 = vmatpush.msra.mxu0 0.0
        %1323 = vmatpush.msra.mxu0 0.0
        %1324 = vmatpush.msra.mxu0 0.0
        %1325 = vmatpush.msra.mxu0 0.0
        %1326 = vmatpush.msra.mxu0 0.0
        %1327 = vmatpush.msra.mxu0 0.0
        %1328 = vmatpush.msra.mxu0 0.0
        %1329 = vmatpush.msra.mxu0 0.0
        %1330 = vmatpush.msra.mxu0 0.0
        %1331 = vmatpush.msra.mxu0 0.0
        %1332 = vmatpush.msra.mxu0 0.0
        %1333 = vmatpush.msra.mxu0 0.0
        %v1334 = vand.u32 %v495, 4294901760
        %v1335 = vsub.f32 %v495, %v1334
        %v1336 = vand.u32 %v1335, 4294901760
        %v1337 = vsub.f32 %v1335, %v1336
        %v1338 = vand.u32 %v1337, 4294901760
        %1339 = vmatpush.msra.mxu0 %v1338
        %v1340 = vand.u32 %v1291, 4294901760
        %1341 = vmatmul.f32.gmra.mxu0 %v1340
        %v1342 = vpop.f32.mrf.mxu0
        %v1343 = vadd.f32 %v1317, %v1342
        %1344 = vdwg.mxu0
        %1345 = vmatpush.msra.mxu0 0.0
        %1346 = vmatpush.msra.mxu0 0.0
        %1347 = vmatpush.msra.mxu0 0.0
        %1348 = vmatpush.msra.mxu0 0.0
        %1349 = vmatpush.msra.mxu0 0.0
        %1350 = vmatpush.msra.mxu0 0.0
        %1351 = vmatpush.msra.mxu0 0.0
        %1352 = vmatpush.msra.mxu0 0.0
        %1353 = vmatpush.msra.mxu0 0.0
        %1354 = vmatpush.msra.mxu0 0.0
        %1355 = vmatpush.msra.mxu0 0.0
        %1356 = vmatpush.msra.mxu0 0.0
        %1357 = vmatpush.msra.mxu0 0.0
        %1358 = vmatpush.msra.mxu0 0.0
        %1359 = vmatpush.msra.mxu0 0.0
        %v1360 = vand.u32 %v495, 4294901760
        %v1361 = vsub.f32 %v495, %v1360
        %1362 = vmatpush.msra.mxu0 %v1361
        %v1363 = vand.u32 %v1291, 4294901760
        %v1364 = vsub.f32 %v1291, %v1363
        %1365 = vmatmul.f32.gmra.mxu0 %v1364
        %v1366 = vpop.f32.mrf.mxu0
        %v1367 = vadd.f32 %v1343, %v1366
        %1368 = vdwg.mxu0
        %1369 = vmatpush.msra.mxu0 0.0
        %1370 = vmatpush.msra.mxu0 0.0
        %1371 = vmatpush.msra.mxu0 0.0
        %1372 = vmatpush.msra.mxu0 0.0
        %1373 = vmatpush.msra.mxu0 0.0
        %1374 = vmatpush.msra.mxu0 0.0
        %1375 = vmatpush.msra.mxu0 0.0
        %1376 = vmatpush.msra.mxu0 0.0
        %1377 = vmatpush.msra.mxu0 0.0
        %1378 = vmatpush.msra.mxu0 0.0
        %1379 = vmatpush.msra.mxu0 0.0
        %1380 = vmatpush.msra.mxu0 0.0
        %1381 = vmatpush.msra.mxu0 0.0
        %1382 = vmatpush.msra.mxu0 0.0
        %1383 = vmatpush.msra.mxu0 0.0
        %v1384 = vand.u32 %v495, 4294901760
        %1385 = vmatpush.msra.mxu0 %v1384
        %v1386 = vand.u32 %v1291, 4294901760
        %v1387 = vsub.f32 %v1291, %v1386
        %v1388 = vand.u32 %v1387, 4294901760
        %1389 = vmatmul.f32.gmra.mxu0 %v1388
        %v1390 = vpop.f32.mrf.mxu0
        %v1391 = vadd.f32 %v1367, %v1390
        %1392 = vdwg.mxu0
        %1393 = vmatpush.msra.mxu0 0.0
        %1394 = vmatpush.msra.mxu0 0.0
        %1395 = vmatpush.msra.mxu0 0.0
        %1396 = vmatpush.msra.mxu0 0.0
        %1397 = vmatpush.msra.mxu0 0.0
        %1398 = vmatpush.msra.mxu0 0.0
        %1399 = vmatpush.msra.mxu0 0.0
        %1400 = vmatpush.msra.mxu0 0.0
        %1401 = vmatpush.msra.mxu0 0.0
        %1402 = vmatpush.msra.mxu0 0.0
        %1403 = vmatpush.msra.mxu0 0.0
        %1404 = vmatpush.msra.mxu0 0.0
        %1405 = vmatpush.msra.mxu0 0.0
        %1406 = vmatpush.msra.mxu0 0.0
        %1407 = vmatpush.msra.mxu0 0.0
        %v1408 = vand.u32 %v495, 4294901760
        %v1409 = vsub.f32 %v495, %v1408
        %v1410 = vand.u32 %v1409, 4294901760
        %1411 = vmatpush.msra.mxu0 %v1410
        %v1412 = vand.u32 %v1291, 4294901760
        %1413 = vmatmul.f32.gmra.mxu0 %v1412
        %v1414 = vpop.f32.mrf.mxu0
        %v1415 = vadd.f32 %v1391, %v1414
        %1416 = vdwg.mxu0
        %1417 = vmatpush.msra.mxu0 0.0
        %1418 = vmatpush.msra.mxu0 0.0
        %1419 = vmatpush.msra.mxu0 0.0
        %1420 = vmatpush.msra.mxu0 0.0
        %1421 = vmatpush.msra.mxu0 0.0
        %1422 = vmatpush.msra.mxu0 0.0
        %1423 = vmatpush.msra.mxu0 0.0
        %1424 = vmatpush.msra.mxu0 0.0
        %1425 = vmatpush.msra.mxu0 0.0
        %1426 = vmatpush.msra.mxu0 0.0
        %1427 = vmatpush.msra.mxu0 0.0
        %1428 = vmatpush.msra.mxu0 0.0
        %1429 = vmatpush.msra.mxu0 0.0
        %1430 = vmatpush.msra.mxu0 0.0
        %1431 = vmatpush.msra.mxu0 0.0
        %v1432 = vand.u32 %v495, 4294901760
        %1433 = vmatpush.msra.mxu0 %v1432
        %v1434 = vand.u32 %v1291, 4294901760
        %1435 = vmatmul.f32.gmra.mxu0 %v1434
        %v1436 = vpop.f32.mrf.mxu0
        %v1437 = vadd.f32 %v1415, %v1436
        %1438 = vdwg.mxu0
        %1439 = vrot.lane.b32.xlu0 %v493, 112
        %v1440 = vpop.permute.xlu0 %1439
        %1441 = vrot.lane.b32.xlu0 %v493, 80
        %v1442 = vpop.permute.xlu0 %1441
        %v1443 = vsel %vm502, %v1440, 0
        %v1445 = vsel %vm502, %v1442, 0
        %1447 = vmatpush.xpose.msra.mxu0 0.0
        %1448 = vmatpush.xpose.msra.mxu0 0.0
        %1449 = vmatpush.xpose.msra.mxu0 0.0
        %1450 = vmatpush.xpose.msra.mxu0 0.0
        %1451 = vmatpush.xpose.msra.mxu0 0.0
        %1452 = vmatpush.xpose.msra.mxu0 0.0
        %1453 = vmatpush.xpose.msra.mxu0 0.0
        %1454 = vmatpush.xpose.msra.mxu0 0.0
        %1455 = vmatpush.xpose.msra.mxu0 0.0
        %1456 = vmatpush.xpose.msra.mxu0 0.0
        %1457 = vmatpush.xpose.msra.mxu0 0.0
        %1458 = vmatpush.xpose.msra.mxu0 0.0
        %1459 = vmatpush.xpose.msra.mxu0 0.0
        %1460 = vmatpush.xpose.msra.mxu0 0.0
        %1461 = vmatpush.xpose.msra.mxu0 0.0
        %v1462 = vand.u32 %v1445, 4294901760
        %1463 = vmatpush.xpose.msra.mxu0 %v1462
        %v1464 = vand.u32 %v1443, 4294901760
        %v1465 = vsub.f32 %v1443, %v1464
        %v1466 = vand.u32 %v1465, 4294901760
        %v1467 = vsub.f32 %v1465, %v1466
        %v1468 = vand.u32 %v1467, 4294901760
        %1469 = vmatmul.f32.gmra.mxu0 %v1468
        %v1470 = vpop.f32.mrf.mxu0
        %v1471 = vadd.f32 0.0, %v1470
        %1472 = vdwg.mxu0
        %1473 = vmatpush.xpose.msra.mxu0 0.0
        %1474 = vmatpush.xpose.msra.mxu0 0.0
        %1475 = vmatpush.xpose.msra.mxu0 0.0
        %1476 = vmatpush.xpose.msra.mxu0 0.0
        %1477 = vmatpush.xpose.msra.mxu0 0.0
        %1478 = vmatpush.xpose.msra.mxu0 0.0
        %1479 = vmatpush.xpose.msra.mxu0 0.0
        %1480 = vmatpush.xpose.msra.mxu0 0.0
        %1481 = vmatpush.xpose.msra.mxu0 0.0
        %1482 = vmatpush.xpose.msra.mxu0 0.0
        %1483 = vmatpush.xpose.msra.mxu0 0.0
        %1484 = vmatpush.xpose.msra.mxu0 0.0
        %1485 = vmatpush.xpose.msra.mxu0 0.0
        %1486 = vmatpush.xpose.msra.mxu0 0.0
        %1487 = vmatpush.xpose.msra.mxu0 0.0
        %v1488 = vand.u32 %v1445, 4294901760
        %v1489 = vsub.f32 %v1445, %v1488
        %v1490 = vand.u32 %v1489, 4294901760
        %v1491 = vsub.f32 %v1489, %v1490
        %v1492 = vand.u32 %v1491, 4294901760
        %1493 = vmatpush.xpose.msra.mxu0 %v1492
        %v1494 = vand.u32 %v1443, 4294901760
        %1495 = vmatmul.f32.gmra.mxu0 %v1494
        %v1496 = vpop.f32.mrf.mxu0
        %v1497 = vadd.f32 %v1471, %v1496
        %1498 = vdwg.mxu0
        %1499 = vmatpush.xpose.msra.mxu0 0.0
        %1500 = vmatpush.xpose.msra.mxu0 0.0
        %1501 = vmatpush.xpose.msra.mxu0 0.0
        %1502 = vmatpush.xpose.msra.mxu0 0.0
        %1503 = vmatpush.xpose.msra.mxu0 0.0
        %1504 = vmatpush.xpose.msra.mxu0 0.0
        %1505 = vmatpush.xpose.msra.mxu0 0.0
        %1506 = vmatpush.xpose.msra.mxu0 0.0
        %1507 = vmatpush.xpose.msra.mxu0 0.0
        %1508 = vmatpush.xpose.msra.mxu0 0.0
        %1509 = vmatpush.xpose.msra.mxu0 0.0
        %1510 = vmatpush.xpose.msra.mxu0 0.0
        %1511 = vmatpush.xpose.msra.mxu0 0.0
        %1512 = vmatpush.xpose.msra.mxu0 0.0
        %1513 = vmatpush.xpose.msra.mxu0 0.0
        %v1514 = vand.u32 %v1445, 4294901760
        %v1515 = vsub.f32 %v1445, %v1514
        %1516 = vmatpush.xpose.msra.mxu0 %v1515
        %v1517 = vand.u32 %v1443, 4294901760
        %v1518 = vsub.f32 %v1443, %v1517
        %1519 = vmatmul.f32.gmra.mxu0 %v1518
        %v1520 = vpop.f32.mrf.mxu0
        %v1521 = vadd.f32 %v1497, %v1520
        %1522 = vdwg.mxu0
        %1523 = vmatpush.xpose.msra.mxu0 0.0
        %1524 = vmatpush.xpose.msra.mxu0 0.0
        %1525 = vmatpush.xpose.msra.mxu0 0.0
        %1526 = vmatpush.xpose.msra.mxu0 0.0
        %1527 = vmatpush.xpose.msra.mxu0 0.0
        %1528 = vmatpush.xpose.msra.mxu0 0.0
        %1529 = vmatpush.xpose.msra.mxu0 0.0
        %1530 = vmatpush.xpose.msra.mxu0 0.0
        %1531 = vmatpush.xpose.msra.mxu0 0.0
        %1532 = vmatpush.xpose.msra.mxu0 0.0
        %1533 = vmatpush.xpose.msra.mxu0 0.0
        %1534 = vmatpush.xpose.msra.mxu0 0.0
        %1535 = vmatpush.xpose.msra.mxu0 0.0
        %1536 = vmatpush.xpose.msra.mxu0 0.0
        %1537 = vmatpush.xpose.msra.mxu0 0.0
        %v1538 = vand.u32 %v1445, 4294901760
        %1539 = vmatpush.xpose.msra.mxu0 %v1538
        %v1540 = vand.u32 %v1443, 4294901760
        %v1541 = vsub.f32 %v1443, %v1540
        %v1542 = vand.u32 %v1541, 4294901760
        %1543 = vmatmul.f32.gmra.mxu0 %v1542
        %v1544 = vpop.f32.mrf.mxu0
        %v1545 = vadd.f32 %v1521, %v1544
        %1546 = vdwg.mxu0
        %1547 = vmatpush.xpose.msra.mxu0 0.0
        %1548 = vmatpush.xpose.msra.mxu0 0.0
        %1549 = vmatpush.xpose.msra.mxu0 0.0
        %1550 = vmatpush.xpose.msra.mxu0 0.0
        %1551 = vmatpush.xpose.msra.mxu0 0.0
        %1552 = vmatpush.xpose.msra.mxu0 0.0
        %1553 = vmatpush.xpose.msra.mxu0 0.0
        %1554 = vmatpush.xpose.msra.mxu0 0.0
        %1555 = vmatpush.xpose.msra.mxu0 0.0
        %1556 = vmatpush.xpose.msra.mxu0 0.0
        %1557 = vmatpush.xpose.msra.mxu0 0.0
        %1558 = vmatpush.xpose.msra.mxu0 0.0
        %1559 = vmatpush.xpose.msra.mxu0 0.0
        %1560 = vmatpush.xpose.msra.mxu0 0.0
        %1561 = vmatpush.xpose.msra.mxu0 0.0
        %v1562 = vand.u32 %v1445, 4294901760
        %v1563 = vsub.f32 %v1445, %v1562
        %v1564 = vand.u32 %v1563, 4294901760
        %1565 = vmatpush.xpose.msra.mxu0 %v1564
        %v1566 = vand.u32 %v1443, 4294901760
        %1567 = vmatmul.f32.gmra.mxu0 %v1566
        %v1568 = vpop.f32.mrf.mxu0
        %v1569 = vadd.f32 %v1545, %v1568
        %1570 = vdwg.mxu0
        %1571 = vmatpush.xpose.msra.mxu0 0.0
        %1572 = vmatpush.xpose.msra.mxu0 0.0
        %1573 = vmatpush.xpose.msra.mxu0 0.0
        %1574 = vmatpush.xpose.msra.mxu0 0.0
        %1575 = vmatpush.xpose.msra.mxu0 0.0
        %1576 = vmatpush.xpose.msra.mxu0 0.0
        %1577 = vmatpush.xpose.msra.mxu0 0.0
        %1578 = vmatpush.xpose.msra.mxu0 0.0
        %1579 = vmatpush.xpose.msra.mxu0 0.0
        %1580 = vmatpush.xpose.msra.mxu0 0.0
        %1581 = vmatpush.xpose.msra.mxu0 0.0
        %1582 = vmatpush.xpose.msra.mxu0 0.0
        %1583 = vmatpush.xpose.msra.mxu0 0.0
        %1584 = vmatpush.xpose.msra.mxu0 0.0
        %1585 = vmatpush.xpose.msra.mxu0 0.0
        %v1586 = vand.u32 %v1445, 4294901760
        %1587 = vmatpush.xpose.msra.mxu0 %v1586
        %v1588 = vand.u32 %v1443, 4294901760
        %1589 = vmatmul.f32.gmra.mxu0 %v1588
        %v1590 = vpop.f32.mrf.mxu0
        %v1591 = vadd.f32 %v1569, %v1590
        %1592 = vdwg.mxu0
        %v1593 = vmul.f32 %v1591, 0.35355338
        %v1594 = vsel %vm502, %v1593, -inf
        %1595 = vmax.xlane.f32.xlu0 %v1594
        %v1596 = vpop.xlane.xlu0 %1595
        %v1597 = vsub.f32 %v1593, %v1596
        %v1598 = vmul.f32 %v1597, 1.442695
        %v1599 = vpow.pop %v1598
        %v1600 = vsel %vm502, %v1599, 0.0
        %1601 = vadd.xlane.f32.xlu0 %v1600
        %v1602 = vpop.xlane.xlu0 %1601
        %v1603 = vrcp.pop %v1602
        %v1604 = vmul.f32 %v1602, %v1603
        %v1605 = vsub.f32 2.0, %v1604
        %v1606 = vmul.f32 %v1603, %v1605
        %v1607 = vmul.f32 %v1599, %v1606
        %1608 = vrot.lane.b32.xlu0 %v493, 48
        %v1609 = vpop.permute.xlu0 %1608
        %v1612 = vsel %vm502, %v1607, 0
        %1614 = vmatpush.msra.mxu0 0.0
        %1615 = vmatpush.msra.mxu0 0.0
        %1616 = vmatpush.msra.mxu0 0.0
        %1617 = vmatpush.msra.mxu0 0.0
        %1618 = vmatpush.msra.mxu0 0.0
        %1619 = vmatpush.msra.mxu0 0.0
        %1620 = vmatpush.msra.mxu0 0.0
        %1621 = vmatpush.msra.mxu0 0.0
        %1622 = vmatpush.msra.mxu0 0.0
        %1623 = vmatpush.msra.mxu0 0.0
        %1624 = vmatpush.msra.mxu0 0.0
        %1625 = vmatpush.msra.mxu0 0.0
        %1626 = vmatpush.msra.mxu0 0.0
        %1627 = vmatpush.msra.mxu0 0.0
        %1628 = vmatpush.msra.mxu0 0.0
        %v1629 = vand.u32 %v1609, 4294901760
        %1630 = vmatpush.msra.mxu0 %v1629
        %v1631 = vand.u32 %v1612, 4294901760
        %v1632 = vsub.f32 %v1612, %v1631
        %v1633 = vand.u32 %v1632, 4294901760
        %v1634 = vsub.f32 %v1632, %v1633
        %v1635 = vand.u32 %v1634, 4294901760
        %1636 = vmatmul.f32.gmra.mxu0 %v1635
        %v1637 = vpop.f32.mrf.mxu0
        %v1638 = vadd.f32 0.0, %v1637
        %1639 = vdwg.mxu0
        %1640 = vmatpush.msra.mxu0 0.0
        %1641 = vmatpush.msra.mxu0 0.0
        %1642 = vmatpush.msra.mxu0 0.0
        %1643 = vmatpush.msra.mxu0 0.0
        %1644 = vmatpush.msra.mxu0 0.0
        %1645 = vmatpush.msra.mxu0 0.0
        %1646 = vmatpush.msra.mxu0 0.0
        %1647 = vmatpush.msra.mxu0 0.0
        %1648 = vmatpush.msra.mxu0 0.0
        %1649 = vmatpush.msra.mxu0 0.0
        %1650 = vmatpush.msra.mxu0 0.0
        %1651 = vmatpush.msra.mxu0 0.0
        %1652 = vmatpush.msra.mxu0 0.0
        %1653 = vmatpush.msra.mxu0 0.0
        %1654 = vmatpush.msra.mxu0 0.0
        %v1655 = vand.u32 %v1609, 4294901760
        %v1656 = vsub.f32 %v1609, %v1655
        %v1657 = vand.u32 %v1656, 4294901760
        %v1658 = vsub.f32 %v1656, %v1657
        %v1659 = vand.u32 %v1658, 4294901760
        %1660 = vmatpush.msra.mxu0 %v1659
        %v1661 = vand.u32 %v1612, 4294901760
        %1662 = vmatmul.f32.gmra.mxu0 %v1661
        %v1663 = vpop.f32.mrf.mxu0
        %v1664 = vadd.f32 %v1638, %v1663
        %1665 = vdwg.mxu0
        %1666 = vmatpush.msra.mxu0 0.0
        %1667 = vmatpush.msra.mxu0 0.0
        %1668 = vmatpush.msra.mxu0 0.0
        %1669 = vmatpush.msra.mxu0 0.0
        %1670 = vmatpush.msra.mxu0 0.0
        %1671 = vmatpush.msra.mxu0 0.0
        %1672 = vmatpush.msra.mxu0 0.0
        %1673 = vmatpush.msra.mxu0 0.0
        %1674 = vmatpush.msra.mxu0 0.0
        %1675 = vmatpush.msra.mxu0 0.0
        %1676 = vmatpush.msra.mxu0 0.0
        %1677 = vmatpush.msra.mxu0 0.0
        %1678 = vmatpush.msra.mxu0 0.0
        %1679 = vmatpush.msra.mxu0 0.0
        %1680 = vmatpush.msra.mxu0 0.0
        %v1681 = vand.u32 %v1609, 4294901760
        %v1682 = vsub.f32 %v1609, %v1681
        %1683 = vmatpush.msra.mxu0 %v1682
        %v1684 = vand.u32 %v1612, 4294901760
        %v1685 = vsub.f32 %v1612, %v1684
        %1686 = vmatmul.f32.gmra.mxu0 %v1685
        %v1687 = vpop.f32.mrf.mxu0
        %v1688 = vadd.f32 %v1664, %v1687
        %1689 = vdwg.mxu0
        %1690 = vmatpush.msra.mxu0 0.0
        %1691 = vmatpush.msra.mxu0 0.0
        %1692 = vmatpush.msra.mxu0 0.0
        %1693 = vmatpush.msra.mxu0 0.0
        %1694 = vmatpush.msra.mxu0 0.0
        %1695 = vmatpush.msra.mxu0 0.0
        %1696 = vmatpush.msra.mxu0 0.0
        %1697 = vmatpush.msra.mxu0 0.0
        %1698 = vmatpush.msra.mxu0 0.0
        %1699 = vmatpush.msra.mxu0 0.0
        %1700 = vmatpush.msra.mxu0 0.0
        %1701 = vmatpush.msra.mxu0 0.0
        %1702 = vmatpush.msra.mxu0 0.0
        %1703 = vmatpush.msra.mxu0 0.0
        %1704 = vmatpush.msra.mxu0 0.0
        %v1705 = vand.u32 %v1609, 4294901760
        %1706 = vmatpush.msra.mxu0 %v1705
        %v1707 = vand.u32 %v1612, 4294901760
        %v1708 = vsub.f32 %v1612, %v1707
        %v1709 = vand.u32 %v1708, 4294901760
        %1710 = vmatmul.f32.gmra.mxu0 %v1709
        %v1711 = vpop.f32.mrf.mxu0
        %v1712 = vadd.f32 %v1688, %v1711
        %1713 = vdwg.mxu0
        %1714 = vmatpush.msra.mxu0 0.0
        %1715 = vmatpush.msra.mxu0 0.0
        %1716 = vmatpush.msra.mxu0 0.0
        %1717 = vmatpush.msra.mxu0 0.0
        %1718 = vmatpush.msra.mxu0 0.0
        %1719 = vmatpush.msra.mxu0 0.0
        %1720 = vmatpush.msra.mxu0 0.0
        %1721 = vmatpush.msra.mxu0 0.0
        %1722 = vmatpush.msra.mxu0 0.0
        %1723 = vmatpush.msra.mxu0 0.0
        %1724 = vmatpush.msra.mxu0 0.0
        %1725 = vmatpush.msra.mxu0 0.0
        %1726 = vmatpush.msra.mxu0 0.0
        %1727 = vmatpush.msra.mxu0 0.0
        %1728 = vmatpush.msra.mxu0 0.0
        %v1729 = vand.u32 %v1609, 4294901760
        %v1730 = vsub.f32 %v1609, %v1729
        %v1731 = vand.u32 %v1730, 4294901760
        %1732 = vmatpush.msra.mxu0 %v1731
        %v1733 = vand.u32 %v1612, 4294901760
        %1734 = vmatmul.f32.gmra.mxu0 %v1733
        %v1735 = vpop.f32.mrf.mxu0
        %v1736 = vadd.f32 %v1712, %v1735
        %1737 = vdwg.mxu0
        %1738 = vmatpush.msra.mxu0 0.0
        %1739 = vmatpush.msra.mxu0 0.0
        %1740 = vmatpush.msra.mxu0 0.0
        %1741 = vmatpush.msra.mxu0 0.0
        %1742 = vmatpush.msra.mxu0 0.0
        %1743 = vmatpush.msra.mxu0 0.0
        %1744 = vmatpush.msra.mxu0 0.0
        %1745 = vmatpush.msra.mxu0 0.0
        %1746 = vmatpush.msra.mxu0 0.0
        %1747 = vmatpush.msra.mxu0 0.0
        %1748 = vmatpush.msra.mxu0 0.0
        %1749 = vmatpush.msra.mxu0 0.0
        %1750 = vmatpush.msra.mxu0 0.0
        %1751 = vmatpush.msra.mxu0 0.0
        %1752 = vmatpush.msra.mxu0 0.0
        %v1753 = vand.u32 %v1609, 4294901760
        %1754 = vmatpush.msra.mxu0 %v1753
        %v1755 = vand.u32 %v1612, 4294901760
        %1756 = vmatmul.f32.gmra.mxu0 %v1755
        %v1757 = vpop.f32.mrf.mxu0
        %v1758 = vadd.f32 %v1736, %v1757
        %1759 = vdwg.mxu0
        %v1761 = vsel %vm502, %v1758, 0
        %1763 = vmatpush.msra.mxu0 0.0
        %1764 = vmatpush.msra.mxu0 0.0
        %1765 = vmatpush.msra.mxu0 0.0
        %1766 = vmatpush.msra.mxu0 0.0
        %1767 = vmatpush.msra.mxu0 0.0
        %1768 = vmatpush.msra.mxu0 0.0
        %1769 = vmatpush.msra.mxu0 0.0
        %1770 = vmatpush.msra.mxu0 0.0
        %1771 = vmatpush.msra.mxu0 0.0
        %1772 = vmatpush.msra.mxu0 0.0
        %1773 = vmatpush.msra.mxu0 0.0
        %1774 = vmatpush.msra.mxu0 0.0
        %1775 = vmatpush.msra.mxu0 0.0
        %1776 = vmatpush.msra.mxu0 0.0
        %1777 = vmatpush.msra.mxu0 0.0
        %v1778 = vand.u32 %v497, 4294901760
        %1779 = vmatpush.msra.mxu0 %v1778
        %v1780 = vand.u32 %v1761, 4294901760
        %v1781 = vsub.f32 %v1761, %v1780
        %v1782 = vand.u32 %v1781, 4294901760
        %v1783 = vsub.f32 %v1781, %v1782
        %v1784 = vand.u32 %v1783, 4294901760
        %1785 = vmatmul.f32.gmra.mxu0 %v1784
        %v1786 = vpop.f32.mrf.mxu0
        %v1787 = vadd.f32 0.0, %v1786
        %1788 = vdwg.mxu0
        %1789 = vmatpush.msra.mxu0 0.0
        %1790 = vmatpush.msra.mxu0 0.0
        %1791 = vmatpush.msra.mxu0 0.0
        %1792 = vmatpush.msra.mxu0 0.0
        %1793 = vmatpush.msra.mxu0 0.0
        %1794 = vmatpush.msra.mxu0 0.0
        %1795 = vmatpush.msra.mxu0 0.0
        %1796 = vmatpush.msra.mxu0 0.0
        %1797 = vmatpush.msra.mxu0 0.0
        %1798 = vmatpush.msra.mxu0 0.0
        %1799 = vmatpush.msra.mxu0 0.0
        %1800 = vmatpush.msra.mxu0 0.0
        %1801 = vmatpush.msra.mxu0 0.0
        %1802 = vmatpush.msra.mxu0 0.0
        %1803 = vmatpush.msra.mxu0 0.0
        %v1804 = vand.u32 %v497, 4294901760
        %v1805 = vsub.f32 %v497, %v1804
        %v1806 = vand.u32 %v1805, 4294901760
        %v1807 = vsub.f32 %v1805, %v1806
        %v1808 = vand.u32 %v1807, 4294901760
        %1809 = vmatpush.msra.mxu0 %v1808
        %v1810 = vand.u32 %v1761, 4294901760
        %1811 = vmatmul.f32.gmra.mxu0 %v1810
        %v1812 = vpop.f32.mrf.mxu0
        %v1813 = vadd.f32 %v1787, %v1812
        %1814 = vdwg.mxu0
        %1815 = vmatpush.msra.mxu0 0.0
        %1816 = vmatpush.msra.mxu0 0.0
        %1817 = vmatpush.msra.mxu0 0.0
        %1818 = vmatpush.msra.mxu0 0.0
        %1819 = vmatpush.msra.mxu0 0.0
        %1820 = vmatpush.msra.mxu0 0.0
        %1821 = vmatpush.msra.mxu0 0.0
        %1822 = vmatpush.msra.mxu0 0.0
        %1823 = vmatpush.msra.mxu0 0.0
        %1824 = vmatpush.msra.mxu0 0.0
        %1825 = vmatpush.msra.mxu0 0.0
        %1826 = vmatpush.msra.mxu0 0.0
        %1827 = vmatpush.msra.mxu0 0.0
        %1828 = vmatpush.msra.mxu0 0.0
        %1829 = vmatpush.msra.mxu0 0.0
        %v1830 = vand.u32 %v497, 4294901760
        %v1831 = vsub.f32 %v497, %v1830
        %1832 = vmatpush.msra.mxu0 %v1831
        %v1833 = vand.u32 %v1761, 4294901760
        %v1834 = vsub.f32 %v1761, %v1833
        %1835 = vmatmul.f32.gmra.mxu0 %v1834
        %v1836 = vpop.f32.mrf.mxu0
        %v1837 = vadd.f32 %v1813, %v1836
        %1838 = vdwg.mxu0
        %1839 = vmatpush.msra.mxu0 0.0
        %1840 = vmatpush.msra.mxu0 0.0
        %1841 = vmatpush.msra.mxu0 0.0
        %1842 = vmatpush.msra.mxu0 0.0
        %1843 = vmatpush.msra.mxu0 0.0
        %1844 = vmatpush.msra.mxu0 0.0
        %1845 = vmatpush.msra.mxu0 0.0
        %1846 = vmatpush.msra.mxu0 0.0
        %1847 = vmatpush.msra.mxu0 0.0
        %1848 = vmatpush.msra.mxu0 0.0
        %1849 = vmatpush.msra.mxu0 0.0
        %1850 = vmatpush.msra.mxu0 0.0
        %1851 = vmatpush.msra.mxu0 0.0
        %1852 = vmatpush.msra.mxu0 0.0
        %1853 = vmatpush.msra.mxu0 0.0
        %v1854 = vand.u32 %v497, 4294901760
        %1855 = vmatpush.msra.mxu0 %v1854
        %v1856 = vand.u32 %v1761, 4294901760
        %v1857 = vsub.f32 %v1761, %v1856
        %v1858 = vand.u32 %v1857, 4294901760
        %1859 = vmatmul.f32.gmra.mxu0 %v1858
        %v1860 = vpop.f32.mrf.mxu0
        %v1861 = vadd.f32 %v1837, %v1860
        %1862 = vdwg.mxu0
        %1863 = vmatpush.msra.mxu0 0.0
        %1864 = vmatpush.msra.mxu0 0.0
        %1865 = vmatpush.msra.mxu0 0.0
        %1866 = vmatpush.msra.mxu0 0.0
        %1867 = vmatpush.msra.mxu0 0.0
        %1868 = vmatpush.msra.mxu0 0.0
        %1869 = vmatpush.msra.mxu0 0.0
        %1870 = vmatpush.msra.mxu0 0.0
        %1871 = vmatpush.msra.mxu0 0.0
        %1872 = vmatpush.msra.mxu0 0.0
        %1873 = vmatpush.msra.mxu0 0.0
        %1874 = vmatpush.msra.mxu0 0.0
        %1875 = vmatpush.msra.mxu0 0.0
        %1876 = vmatpush.msra.mxu0 0.0
        %1877 = vmatpush.msra.mxu0 0.0
        %v1878 = vand.u32 %v497, 4294901760
        %v1879 = vsub.f32 %v497, %v1878
        %v1880 = vand.u32 %v1879, 4294901760
        %1881 = vmatpush.msra.mxu0 %v1880
        %v1882 = vand.u32 %v1761, 4294901760
        %1883 = vmatmul.f32.gmra.mxu0 %v1882
        %v1884 = vpop.f32.mrf.mxu0
        %v1885 = vadd.f32 %v1861, %v1884
        %1886 = vdwg.mxu0
        %1887 = vmatpush.msra.mxu0 0.0
        %1888 = vmatpush.msra.mxu0 0.0
        %1889 = vmatpush.msra.mxu0 0.0
        %1890 = vmatpush.msra.mxu0 0.0
        %1891 = vmatpush.msra.mxu0 0.0
        %1892 = vmatpush.msra.mxu0 0.0
        %1893 = vmatpush.msra.mxu0 0.0
        %1894 = vmatpush.msra.mxu0 0.0
        %1895 = vmatpush.msra.mxu0 0.0
        %1896 = vmatpush.msra.mxu0 0.0
        %1897 = vmatpush.msra.mxu0 0.0
        %1898 = vmatpush.msra.mxu0 0.0
        %1899 = vmatpush.msra.mxu0 0.0
        %1900 = vmatpush.msra.mxu0 0.0
        %1901 = vmatpush.msra.mxu0 0.0
        %v1902 = vand.u32 %v497, 4294901760
        %1903 = vmatpush.msra.mxu0 %v1902
        %v1904 = vand.u32 %v1761, 4294901760
        %1905 = vmatmul.f32.gmra.mxu0 %v1904
        %v1906 = vpop.f32.mrf.mxu0
        %v1907 = vadd.f32 %v1885, %v1906
        %1908 = vdwg.mxu0
        %v1909 = vadd.f32 %v1437, %v1907
        %1910 = vrot.lane.b32.xlu0 %v493, 104
        %v1911 = vpop.permute.xlu0 %1910
        %1912 = vrot.lane.b32.xlu0 %v493, 72
        %v1913 = vpop.permute.xlu0 %1912
        %v1914 = vsel %vm502, %v1911, 0
        %v1916 = vsel %vm502, %v1913, 0
        %1918 = vmatpush.xpose.msra.mxu0 0.0
        %1919 = vmatpush.xpose.msra.mxu0 0.0
        %1920 = vmatpush.xpose.msra.mxu0 0.0
        %1921 = vmatpush.xpose.msra.mxu0 0.0
        %1922 = vmatpush.xpose.msra.mxu0 0.0
        %1923 = vmatpush.xpose.msra.mxu0 0.0
        %1924 = vmatpush.xpose.msra.mxu0 0.0
        %1925 = vmatpush.xpose.msra.mxu0 0.0
        %1926 = vmatpush.xpose.msra.mxu0 0.0
        %1927 = vmatpush.xpose.msra.mxu0 0.0
        %1928 = vmatpush.xpose.msra.mxu0 0.0
        %1929 = vmatpush.xpose.msra.mxu0 0.0
        %1930 = vmatpush.xpose.msra.mxu0 0.0
        %1931 = vmatpush.xpose.msra.mxu0 0.0
        %1932 = vmatpush.xpose.msra.mxu0 0.0
        %v1933 = vand.u32 %v1916, 4294901760
        %1934 = vmatpush.xpose.msra.mxu0 %v1933
        %v1935 = vand.u32 %v1914, 4294901760
        %v1936 = vsub.f32 %v1914, %v1935
        %v1937 = vand.u32 %v1936, 4294901760
        %v1938 = vsub.f32 %v1936, %v1937
        %v1939 = vand.u32 %v1938, 4294901760
        %1940 = vmatmul.f32.gmra.mxu0 %v1939
        %v1941 = vpop.f32.mrf.mxu0
        %v1942 = vadd.f32 0.0, %v1941
        %1943 = vdwg.mxu0
        %1944 = vmatpush.xpose.msra.mxu0 0.0
        %1945 = vmatpush.xpose.msra.mxu0 0.0
        %1946 = vmatpush.xpose.msra.mxu0 0.0
        %1947 = vmatpush.xpose.msra.mxu0 0.0
        %1948 = vmatpush.xpose.msra.mxu0 0.0
        %1949 = vmatpush.xpose.msra.mxu0 0.0
        %1950 = vmatpush.xpose.msra.mxu0 0.0
        %1951 = vmatpush.xpose.msra.mxu0 0.0
        %1952 = vmatpush.xpose.msra.mxu0 0.0
        %1953 = vmatpush.xpose.msra.mxu0 0.0
        %1954 = vmatpush.xpose.msra.mxu0 0.0
        %1955 = vmatpush.xpose.msra.mxu0 0.0
        %1956 = vmatpush.xpose.msra.mxu0 0.0
        %1957 = vmatpush.xpose.msra.mxu0 0.0
        %1958 = vmatpush.xpose.msra.mxu0 0.0
        %v1959 = vand.u32 %v1916, 4294901760
        %v1960 = vsub.f32 %v1916, %v1959
        %v1961 = vand.u32 %v1960, 4294901760
        %v1962 = vsub.f32 %v1960, %v1961
        %v1963 = vand.u32 %v1962, 4294901760
        %1964 = vmatpush.xpose.msra.mxu0 %v1963
        %v1965 = vand.u32 %v1914, 4294901760
        %1966 = vmatmul.f32.gmra.mxu0 %v1965
        %v1967 = vpop.f32.mrf.mxu0
        %v1968 = vadd.f32 %v1942, %v1967
        %1969 = vdwg.mxu0
        %1970 = vmatpush.xpose.msra.mxu0 0.0
        %1971 = vmatpush.xpose.msra.mxu0 0.0
        %1972 = vmatpush.xpose.msra.mxu0 0.0
        %1973 = vmatpush.xpose.msra.mxu0 0.0
        %1974 = vmatpush.xpose.msra.mxu0 0.0
        %1975 = vmatpush.xpose.msra.mxu0 0.0
        %1976 = vmatpush.xpose.msra.mxu0 0.0
        %1977 = vmatpush.xpose.msra.mxu0 0.0
        %1978 = vmatpush.xpose.msra.mxu0 0.0
        %1979 = vmatpush.xpose.msra.mxu0 0.0
        %1980 = vmatpush.xpose.msra.mxu0 0.0
        %1981 = vmatpush.xpose.msra.mxu0 0.0
        %1982 = vmatpush.xpose.msra.mxu0 0.0
        %1983 = vmatpush.xpose.msra.mxu0 0.0
        %1984 = vmatpush.xpose.msra.mxu0 0.0
        %v1985 = vand.u32 %v1916, 4294901760
        %v1986 = vsub.f32 %v1916, %v1985
        %1987 = vmatpush.xpose.msra.mxu0 %v1986
        %v1988 = vand.u32 %v1914, 4294901760
        %v1989 = vsub.f32 %v1914, %v1988
        %1990 = vmatmul.f32.gmra.mxu0 %v1989
        %v1991 = vpop.f32.mrf.mxu0
        %v1992 = vadd.f32 %v1968, %v1991
        %1993 = vdwg.mxu0
        %1994 = vmatpush.xpose.msra.mxu0 0.0
        %1995 = vmatpush.xpose.msra.mxu0 0.0
        %1996 = vmatpush.xpose.msra.mxu0 0.0
        %1997 = vmatpush.xpose.msra.mxu0 0.0
        %1998 = vmatpush.xpose.msra.mxu0 0.0
        %1999 = vmatpush.xpose.msra.mxu0 0.0
        %2000 = vmatpush.xpose.msra.mxu0 0.0
        %2001 = vmatpush.xpose.msra.mxu0 0.0
        %2002 = vmatpush.xpose.msra.mxu0 0.0
        %2003 = vmatpush.xpose.msra.mxu0 0.0
        %2004 = vmatpush.xpose.msra.mxu0 0.0
        %2005 = vmatpush.xpose.msra.mxu0 0.0
        %2006 = vmatpush.xpose.msra.mxu0 0.0
        %2007 = vmatpush.xpose.msra.mxu0 0.0
        %2008 = vmatpush.xpose.msra.mxu0 0.0
        %v2009 = vand.u32 %v1916, 4294901760
        %2010 = vmatpush.xpose.msra.mxu0 %v2009
        %v2011 = vand.u32 %v1914, 4294901760
        %v2012 = vsub.f32 %v1914, %v2011
        %v2013 = vand.u32 %v2012, 4294901760
        %2014 = vmatmul.f32.gmra.mxu0 %v2013
        %v2015 = vpop.f32.mrf.mxu0
        %v2016 = vadd.f32 %v1992, %v2015
        %2017 = vdwg.mxu0
        %2018 = vmatpush.xpose.msra.mxu0 0.0
        %2019 = vmatpush.xpose.msra.mxu0 0.0
        %2020 = vmatpush.xpose.msra.mxu0 0.0
        %2021 = vmatpush.xpose.msra.mxu0 0.0
        %2022 = vmatpush.xpose.msra.mxu0 0.0
        %2023 = vmatpush.xpose.msra.mxu0 0.0
        %2024 = vmatpush.xpose.msra.mxu0 0.0
        %2025 = vmatpush.xpose.msra.mxu0 0.0
        %2026 = vmatpush.xpose.msra.mxu0 0.0
        %2027 = vmatpush.xpose.msra.mxu0 0.0
        %2028 = vmatpush.xpose.msra.mxu0 0.0
        %2029 = vmatpush.xpose.msra.mxu0 0.0
        %2030 = vmatpush.xpose.msra.mxu0 0.0
        %2031 = vmatpush.xpose.msra.mxu0 0.0
        %2032 = vmatpush.xpose.msra.mxu0 0.0
        %v2033 = vand.u32 %v1916, 4294901760
        %v2034 = vsub.f32 %v1916, %v2033
        %v2035 = vand.u32 %v2034, 4294901760
        %2036 = vmatpush.xpose.msra.mxu0 %v2035
        %v2037 = vand.u32 %v1914, 4294901760
        %2038 = vmatmul.f32.gmra.mxu0 %v2037
        %v2039 = vpop.f32.mrf.mxu0
        %v2040 = vadd.f32 %v2016, %v2039
        %2041 = vdwg.mxu0
        %2042 = vmatpush.xpose.msra.mxu0 0.0
        %2043 = vmatpush.xpose.msra.mxu0 0.0
        %2044 = vmatpush.xpose.msra.mxu0 0.0
        %2045 = vmatpush.xpose.msra.mxu0 0.0
        %2046 = vmatpush.xpose.msra.mxu0 0.0
        %2047 = vmatpush.xpose.msra.mxu0 0.0
        %2048 = vmatpush.xpose.msra.mxu0 0.0
        %2049 = vmatpush.xpose.msra.mxu0 0.0
        %2050 = vmatpush.xpose.msra.mxu0 0.0
        %2051 = vmatpush.xpose.msra.mxu0 0.0
        %2052 = vmatpush.xpose.msra.mxu0 0.0
        %2053 = vmatpush.xpose.msra.mxu0 0.0
        %2054 = vmatpush.xpose.msra.mxu0 0.0
        %2055 = vmatpush.xpose.msra.mxu0 0.0
        %2056 = vmatpush.xpose.msra.mxu0 0.0
        %v2057 = vand.u32 %v1916, 4294901760
        %2058 = vmatpush.xpose.msra.mxu0 %v2057
        %v2059 = vand.u32 %v1914, 4294901760
        %2060 = vmatmul.f32.gmra.mxu0 %v2059
        %v2061 = vpop.f32.mrf.mxu0
        %v2062 = vadd.f32 %v2040, %v2061
        %2063 = vdwg.mxu0
        %v2064 = vmul.f32 %v2062, 0.35355338
        %v2065 = vsel %vm502, %v2064, -inf
        %2066 = vmax.xlane.f32.xlu0 %v2065
        %v2067 = vpop.xlane.xlu0 %2066
        %v2068 = vsub.f32 %v2064, %v2067
        %v2069 = vmul.f32 %v2068, 1.442695
        %v2070 = vpow.pop %v2069
        %v2071 = vsel %vm502, %v2070, 0.0
        %2072 = vadd.xlane.f32.xlu0 %v2071
        %v2073 = vpop.xlane.xlu0 %2072
        %v2074 = vrcp.pop %v2073
        %v2075 = vmul.f32 %v2073, %v2074
        %v2076 = vsub.f32 2.0, %v2075
        %v2077 = vmul.f32 %v2074, %v2076
        %v2078 = vmul.f32 %v2070, %v2077
        %2079 = vrot.lane.b32.xlu0 %v493, 40
        %v2080 = vpop.permute.xlu0 %2079
        %v2083 = vsel %vm502, %v2078, 0
        %2085 = vmatpush.msra.mxu0 0.0
        %2086 = vmatpush.msra.mxu0 0.0
        %2087 = vmatpush.msra.mxu0 0.0
        %2088 = vmatpush.msra.mxu0 0.0
        %2089 = vmatpush.msra.mxu0 0.0
        %2090 = vmatpush.msra.mxu0 0.0
        %2091 = vmatpush.msra.mxu0 0.0
        %2092 = vmatpush.msra.mxu0 0.0
        %2093 = vmatpush.msra.mxu0 0.0
        %2094 = vmatpush.msra.mxu0 0.0
        %2095 = vmatpush.msra.mxu0 0.0
        %2096 = vmatpush.msra.mxu0 0.0
        %2097 = vmatpush.msra.mxu0 0.0
        %2098 = vmatpush.msra.mxu0 0.0
        %2099 = vmatpush.msra.mxu0 0.0
        %v2100 = vand.u32 %v2080, 4294901760
        %2101 = vmatpush.msra.mxu0 %v2100
        %v2102 = vand.u32 %v2083, 4294901760
        %v2103 = vsub.f32 %v2083, %v2102
        %v2104 = vand.u32 %v2103, 4294901760
        %v2105 = vsub.f32 %v2103, %v2104
        %v2106 = vand.u32 %v2105, 4294901760
        %2107 = vmatmul.f32.gmra.mxu0 %v2106
        %v2108 = vpop.f32.mrf.mxu0
        %v2109 = vadd.f32 0.0, %v2108
        %2110 = vdwg.mxu0
        %2111 = vmatpush.msra.mxu0 0.0
        %2112 = vmatpush.msra.mxu0 0.0
        %2113 = vmatpush.msra.mxu0 0.0
        %2114 = vmatpush.msra.mxu0 0.0
        %2115 = vmatpush.msra.mxu0 0.0
        %2116 = vmatpush.msra.mxu0 0.0
        %2117 = vmatpush.msra.mxu0 0.0
        %2118 = vmatpush.msra.mxu0 0.0
        %2119 = vmatpush.msra.mxu0 0.0
        %2120 = vmatpush.msra.mxu0 0.0
        %2121 = vmatpush.msra.mxu0 0.0
        %2122 = vmatpush.msra.mxu0 0.0
        %2123 = vmatpush.msra.mxu0 0.0
        %2124 = vmatpush.msra.mxu0 0.0
        %2125 = vmatpush.msra.mxu0 0.0
        %v2126 = vand.u32 %v2080, 4294901760
        %v2127 = vsub.f32 %v2080, %v2126
        %v2128 = vand.u32 %v2127, 4294901760
        %v2129 = vsub.f32 %v2127, %v2128
        %v2130 = vand.u32 %v2129, 4294901760
        %2131 = vmatpush.msra.mxu0 %v2130
        %v2132 = vand.u32 %v2083, 4294901760
        %2133 = vmatmul.f32.gmra.mxu0 %v2132
        %v2134 = vpop.f32.mrf.mxu0
        %v2135 = vadd.f32 %v2109, %v2134
        %2136 = vdwg.mxu0
        %2137 = vmatpush.msra.mxu0 0.0
        %2138 = vmatpush.msra.mxu0 0.0
        %2139 = vmatpush.msra.mxu0 0.0
        %2140 = vmatpush.msra.mxu0 0.0
        %2141 = vmatpush.msra.mxu0 0.0
        %2142 = vmatpush.msra.mxu0 0.0
        %2143 = vmatpush.msra.mxu0 0.0
        %2144 = vmatpush.msra.mxu0 0.0
        %2145 = vmatpush.msra.mxu0 0.0
        %2146 = vmatpush.msra.mxu0 0.0
        %2147 = vmatpush.msra.mxu0 0.0
        %2148 = vmatpush.msra.mxu0 0.0
        %2149 = vmatpush.msra.mxu0 0.0
        %2150 = vmatpush.msra.mxu0 0.0
        %2151 = vmatpush.msra.mxu0 0.0
        %v2152 = vand.u32 %v2080, 4294901760
        %v2153 = vsub.f32 %v2080, %v2152
        %2154 = vmatpush.msra.mxu0 %v2153
        %v2155 = vand.u32 %v2083, 4294901760
        %v2156 = vsub.f32 %v2083, %v2155
        %2157 = vmatmul.f32.gmra.mxu0 %v2156
        %v2158 = vpop.f32.mrf.mxu0
        %v2159 = vadd.f32 %v2135, %v2158
        %2160 = vdwg.mxu0
        %2161 = vmatpush.msra.mxu0 0.0
        %2162 = vmatpush.msra.mxu0 0.0
        %2163 = vmatpush.msra.mxu0 0.0
        %2164 = vmatpush.msra.mxu0 0.0
        %2165 = vmatpush.msra.mxu0 0.0
        %2166 = vmatpush.msra.mxu0 0.0
        %2167 = vmatpush.msra.mxu0 0.0
        %2168 = vmatpush.msra.mxu0 0.0
        %2169 = vmatpush.msra.mxu0 0.0
        %2170 = vmatpush.msra.mxu0 0.0
        %2171 = vmatpush.msra.mxu0 0.0
        %2172 = vmatpush.msra.mxu0 0.0
        %2173 = vmatpush.msra.mxu0 0.0
        %2174 = vmatpush.msra.mxu0 0.0
        %2175 = vmatpush.msra.mxu0 0.0
        %v2176 = vand.u32 %v2080, 4294901760
        %2177 = vmatpush.msra.mxu0 %v2176
        %v2178 = vand.u32 %v2083, 4294901760
        %v2179 = vsub.f32 %v2083, %v2178
        %v2180 = vand.u32 %v2179, 4294901760
        %2181 = vmatmul.f32.gmra.mxu0 %v2180
        %v2182 = vpop.f32.mrf.mxu0
        %v2183 = vadd.f32 %v2159, %v2182
        %2184 = vdwg.mxu0
        %2185 = vmatpush.msra.mxu0 0.0
        %2186 = vmatpush.msra.mxu0 0.0
        %2187 = vmatpush.msra.mxu0 0.0
        %2188 = vmatpush.msra.mxu0 0.0
        %2189 = vmatpush.msra.mxu0 0.0
        %2190 = vmatpush.msra.mxu0 0.0
        %2191 = vmatpush.msra.mxu0 0.0
        %2192 = vmatpush.msra.mxu0 0.0
        %2193 = vmatpush.msra.mxu0 0.0
        %2194 = vmatpush.msra.mxu0 0.0
        %2195 = vmatpush.msra.mxu0 0.0
        %2196 = vmatpush.msra.mxu0 0.0
        %2197 = vmatpush.msra.mxu0 0.0
        %2198 = vmatpush.msra.mxu0 0.0
        %2199 = vmatpush.msra.mxu0 0.0
        %v2200 = vand.u32 %v2080, 4294901760
        %v2201 = vsub.f32 %v2080, %v2200
        %v2202 = vand.u32 %v2201, 4294901760
        %2203 = vmatpush.msra.mxu0 %v2202
        %v2204 = vand.u32 %v2083, 4294901760
        %2205 = vmatmul.f32.gmra.mxu0 %v2204
        %v2206 = vpop.f32.mrf.mxu0
        %v2207 = vadd.f32 %v2183, %v2206
        %2208 = vdwg.mxu0
        %2209 = vmatpush.msra.mxu0 0.0
        %2210 = vmatpush.msra.mxu0 0.0
        %2211 = vmatpush.msra.mxu0 0.0
        %2212 = vmatpush.msra.mxu0 0.0
        %2213 = vmatpush.msra.mxu0 0.0
        %2214 = vmatpush.msra.mxu0 0.0
        %2215 = vmatpush.msra.mxu0 0.0
        %2216 = vmatpush.msra.mxu0 0.0
        %2217 = vmatpush.msra.mxu0 0.0
        %2218 = vmatpush.msra.mxu0 0.0
        %2219 = vmatpush.msra.mxu0 0.0
        %2220 = vmatpush.msra.mxu0 0.0
        %2221 = vmatpush.msra.mxu0 0.0
        %2222 = vmatpush.msra.mxu0 0.0
        %2223 = vmatpush.msra.mxu0 0.0
        %v2224 = vand.u32 %v2080, 4294901760
        %2225 = vmatpush.msra.mxu0 %v2224
        %v2226 = vand.u32 %v2083, 4294901760
        %2227 = vmatmul.f32.gmra.mxu0 %v2226
        %v2228 = vpop.f32.mrf.mxu0
        %v2229 = vadd.f32 %v2207, %v2228
        %2230 = vdwg.mxu0
        %v2232 = vsel %vm502, %v2229, 0
        %2234 = vmatpush.msra.mxu0 0.0
        %2235 = vmatpush.msra.mxu0 0.0
        %2236 = vmatpush.msra.mxu0 0.0
        %2237 = vmatpush.msra.mxu0 0.0
        %2238 = vmatpush.msra.mxu0 0.0
        %2239 = vmatpush.msra.mxu0 0.0
        %2240 = vmatpush.msra.mxu0 0.0
        %2241 = vmatpush.msra.mxu0 0.0
        %2242 = vmatpush.msra.mxu0 0.0
        %2243 = vmatpush.msra.mxu0 0.0
        %2244 = vmatpush.msra.mxu0 0.0
        %2245 = vmatpush.msra.mxu0 0.0
        %2246 = vmatpush.msra.mxu0 0.0
        %2247 = vmatpush.msra.mxu0 0.0
        %2248 = vmatpush.msra.mxu0 0.0
        %v2249 = vand.u32 %v498, 4294901760
        %2250 = vmatpush.msra.mxu0 %v2249
        %v2251 = vand.u32 %v2232, 4294901760
        %v2252 = vsub.f32 %v2232, %v2251
        %v2253 = vand.u32 %v2252, 4294901760
        %v2254 = vsub.f32 %v2252, %v2253
        %v2255 = vand.u32 %v2254, 4294901760
        %2256 = vmatmul.f32.gmra.mxu0 %v2255
        %v2257 = vpop.f32.mrf.mxu0
        %v2258 = vadd.f32 0.0, %v2257
        %2259 = vdwg.mxu0
        %2260 = vmatpush.msra.mxu0 0.0
        %2261 = vmatpush.msra.mxu0 0.0
        %2262 = vmatpush.msra.mxu0 0.0
        %2263 = vmatpush.msra.mxu0 0.0
        %2264 = vmatpush.msra.mxu0 0.0
        %2265 = vmatpush.msra.mxu0 0.0
        %2266 = vmatpush.msra.mxu0 0.0
        %2267 = vmatpush.msra.mxu0 0.0
        %2268 = vmatpush.msra.mxu0 0.0
        %2269 = vmatpush.msra.mxu0 0.0
        %2270 = vmatpush.msra.mxu0 0.0
        %2271 = vmatpush.msra.mxu0 0.0
        %2272 = vmatpush.msra.mxu0 0.0
        %2273 = vmatpush.msra.mxu0 0.0
        %2274 = vmatpush.msra.mxu0 0.0
        %v2275 = vand.u32 %v498, 4294901760
        %v2276 = vsub.f32 %v498, %v2275
        %v2277 = vand.u32 %v2276, 4294901760
        %v2278 = vsub.f32 %v2276, %v2277
        %v2279 = vand.u32 %v2278, 4294901760
        %2280 = vmatpush.msra.mxu0 %v2279
        %v2281 = vand.u32 %v2232, 4294901760
        %2282 = vmatmul.f32.gmra.mxu0 %v2281
        %v2283 = vpop.f32.mrf.mxu0
        %v2284 = vadd.f32 %v2258, %v2283
        %2285 = vdwg.mxu0
        %2286 = vmatpush.msra.mxu0 0.0
        %2287 = vmatpush.msra.mxu0 0.0
        %2288 = vmatpush.msra.mxu0 0.0
        %2289 = vmatpush.msra.mxu0 0.0
        %2290 = vmatpush.msra.mxu0 0.0
        %2291 = vmatpush.msra.mxu0 0.0
        %2292 = vmatpush.msra.mxu0 0.0
        %2293 = vmatpush.msra.mxu0 0.0
        %2294 = vmatpush.msra.mxu0 0.0
        %2295 = vmatpush.msra.mxu0 0.0
        %2296 = vmatpush.msra.mxu0 0.0
        %2297 = vmatpush.msra.mxu0 0.0
        %2298 = vmatpush.msra.mxu0 0.0
        %2299 = vmatpush.msra.mxu0 0.0
        %2300 = vmatpush.msra.mxu0 0.0
        %v2301 = vand.u32 %v498, 4294901760
        %v2302 = vsub.f32 %v498, %v2301
        %2303 = vmatpush.msra.mxu0 %v2302
        %v2304 = vand.u32 %v2232, 4294901760
        %v2305 = vsub.f32 %v2232, %v2304
        %2306 = vmatmul.f32.gmra.mxu0 %v2305
        %v2307 = vpop.f32.mrf.mxu0
        %v2308 = vadd.f32 %v2284, %v2307
        %2309 = vdwg.mxu0
        %2310 = vmatpush.msra.mxu0 0.0
        %2311 = vmatpush.msra.mxu0 0.0
        %2312 = vmatpush.msra.mxu0 0.0
        %2313 = vmatpush.msra.mxu0 0.0
        %2314 = vmatpush.msra.mxu0 0.0
        %2315 = vmatpush.msra.mxu0 0.0
        %2316 = vmatpush.msra.mxu0 0.0
        %2317 = vmatpush.msra.mxu0 0.0
        %2318 = vmatpush.msra.mxu0 0.0
        %2319 = vmatpush.msra.mxu0 0.0
        %2320 = vmatpush.msra.mxu0 0.0
        %2321 = vmatpush.msra.mxu0 0.0
        %2322 = vmatpush.msra.mxu0 0.0
        %2323 = vmatpush.msra.mxu0 0.0
        %2324 = vmatpush.msra.mxu0 0.0
        %v2325 = vand.u32 %v498, 4294901760
        %2326 = vmatpush.msra.mxu0 %v2325
        %v2327 = vand.u32 %v2232, 4294901760
        %v2328 = vsub.f32 %v2232, %v2327
        %v2329 = vand.u32 %v2328, 4294901760
        %2330 = vmatmul.f32.gmra.mxu0 %v2329
        %v2331 = vpop.f32.mrf.mxu0
        %v2332 = vadd.f32 %v2308, %v2331
        %2333 = vdwg.mxu0
        %2334 = vmatpush.msra.mxu0 0.0
        %2335 = vmatpush.msra.mxu0 0.0
        %2336 = vmatpush.msra.mxu0 0.0
        %2337 = vmatpush.msra.mxu0 0.0
        %2338 = vmatpush.msra.mxu0 0.0
        %2339 = vmatpush.msra.mxu0 0.0
        %2340 = vmatpush.msra.mxu0 0.0
        %2341 = vmatpush.msra.mxu0 0.0
        %2342 = vmatpush.msra.mxu0 0.0
        %2343 = vmatpush.msra.mxu0 0.0
        %2344 = vmatpush.msra.mxu0 0.0
        %2345 = vmatpush.msra.mxu0 0.0
        %2346 = vmatpush.msra.mxu0 0.0
        %2347 = vmatpush.msra.mxu0 0.0
        %2348 = vmatpush.msra.mxu0 0.0
        %v2349 = vand.u32 %v498, 4294901760
        %v2350 = vsub.f32 %v498, %v2349
        %v2351 = vand.u32 %v2350, 4294901760
        %2352 = vmatpush.msra.mxu0 %v2351
        %v2353 = vand.u32 %v2232, 4294901760
        %2354 = vmatmul.f32.gmra.mxu0 %v2353
        %v2355 = vpop.f32.mrf.mxu0
        %v2356 = vadd.f32 %v2332, %v2355
        %2357 = vdwg.mxu0
        %2358 = vmatpush.msra.mxu0 0.0
        %2359 = vmatpush.msra.mxu0 0.0
        %2360 = vmatpush.msra.mxu0 0.0
        %2361 = vmatpush.msra.mxu0 0.0
        %2362 = vmatpush.msra.mxu0 0.0
        %2363 = vmatpush.msra.mxu0 0.0
        %2364 = vmatpush.msra.mxu0 0.0
        %2365 = vmatpush.msra.mxu0 0.0
        %2366 = vmatpush.msra.mxu0 0.0
        %2367 = vmatpush.msra.mxu0 0.0
        %2368 = vmatpush.msra.mxu0 0.0
        %2369 = vmatpush.msra.mxu0 0.0
        %2370 = vmatpush.msra.mxu0 0.0
        %2371 = vmatpush.msra.mxu0 0.0
        %2372 = vmatpush.msra.mxu0 0.0
        %v2373 = vand.u32 %v498, 4294901760
        %2374 = vmatpush.msra.mxu0 %v2373
        %v2375 = vand.u32 %v2232, 4294901760
        %2376 = vmatmul.f32.gmra.mxu0 %v2375
        %v2377 = vpop.f32.mrf.mxu0
        %v2378 = vadd.f32 %v2356, %v2377
        %2379 = vdwg.mxu0
        %v2380 = vadd.f32 %v1909, %v2378
        %v2381 = vadd.f32 %v301, %v2380
        %v2382 = vld [vmem:[#allocation8] sm:$0xff]
        %v2384 = vsel %vm502, %v2382, 0
        %2386 = vmatpush.msra.mxu0 0.0
        %2387 = vmatpush.msra.mxu0 0.0
        %2388 = vmatpush.msra.mxu0 0.0
        %2389 = vmatpush.msra.mxu0 0.0
        %2390 = vmatpush.msra.mxu0 0.0
        %2391 = vmatpush.msra.mxu0 0.0
        %2392 = vmatpush.msra.mxu0 0.0
        %2393 = vmatpush.msra.mxu0 0.0
        %2394 = vmatpush.msra.mxu0 0.0
        %2395 = vmatpush.msra.mxu0 0.0
        %2396 = vmatpush.msra.mxu0 0.0
        %2397 = vmatpush.msra.mxu0 0.0
        %2398 = vmatpush.msra.mxu0 0.0
        %2399 = vmatpush.msra.mxu0 0.0
        %2400 = vmatpush.msra.mxu0 0.0
        %v2401 = vand.u32 %v2381, 4294901760
        %2402 = vmatpush.msra.mxu0 %v2401
        %v2403 = vand.u32 %v2384, 4294901760
        %v2404 = vsub.f32 %v2384, %v2403
        %v2405 = vand.u32 %v2404, 4294901760
        %v2406 = vsub.f32 %v2404, %v2405
        %v2407 = vand.u32 %v2406, 4294901760
        %2408 = vmatmul.f32.gmra.mxu0 %v2407
        %v2409 = vpop.f32.mrf.mxu0
        %v2410 = vadd.f32 0.0, %v2409
        %2411 = vdwg.mxu0
        %2412 = vmatpush.msra.mxu0 0.0
        %2413 = vmatpush.msra.mxu0 0.0
        %2414 = vmatpush.msra.mxu0 0.0
        %2415 = vmatpush.msra.mxu0 0.0
        %2416 = vmatpush.msra.mxu0 0.0
        %2417 = vmatpush.msra.mxu0 0.0
        %2418 = vmatpush.msra.mxu0 0.0
        %2419 = vmatpush.msra.mxu0 0.0
        %2420 = vmatpush.msra.mxu0 0.0
        %2421 = vmatpush.msra.mxu0 0.0
        %2422 = vmatpush.msra.mxu0 0.0
        %2423 = vmatpush.msra.mxu0 0.0
        %2424 = vmatpush.msra.mxu0 0.0
        %2425 = vmatpush.msra.mxu0 0.0
        %2426 = vmatpush.msra.mxu0 0.0
        %v2427 = vand.u32 %v2381, 4294901760
        %v2428 = vsub.f32 %v2381, %v2427
        %v2429 = vand.u32 %v2428, 4294901760
        %v2430 = vsub.f32 %v2428, %v2429
        %v2431 = vand.u32 %v2430, 4294901760
        %2432 = vmatpush.msra.mxu0 %v2431
        %v2433 = vand.u32 %v2384, 4294901760
        %2434 = vmatmul.f32.gmra.mxu0 %v2433
        %v2435 = vpop.f32.mrf.mxu0
        %v2436 = vadd.f32 %v2410, %v2435
        %2437 = vdwg.mxu0
        %2438 = vmatpush.msra.mxu0 0.0
        %2439 = vmatpush.msra.mxu0 0.0
        %2440 = vmatpush.msra.mxu0 0.0
        %2441 = vmatpush.msra.mxu0 0.0
        %2442 = vmatpush.msra.mxu0 0.0
        %2443 = vmatpush.msra.mxu0 0.0
        %2444 = vmatpush.msra.mxu0 0.0
        %2445 = vmatpush.msra.mxu0 0.0
        %2446 = vmatpush.msra.mxu0 0.0
        %2447 = vmatpush.msra.mxu0 0.0
        %2448 = vmatpush.msra.mxu0 0.0
        %2449 = vmatpush.msra.mxu0 0.0
        %2450 = vmatpush.msra.mxu0 0.0
        %2451 = vmatpush.msra.mxu0 0.0
        %2452 = vmatpush.msra.mxu0 0.0
        %v2453 = vand.u32 %v2381, 4294901760
        %v2454 = vsub.f32 %v2381, %v2453
        %2455 = vmatpush.msra.mxu0 %v2454
        %v2456 = vand.u32 %v2384, 4294901760
        %v2457 = vsub.f32 %v2384, %v2456
        %2458 = vmatmul.f32.gmra.mxu0 %v2457
        %v2459 = vpop.f32.mrf.mxu0
        %v2460 = vadd.f32 %v2436, %v2459
        %2461 = vdwg.mxu0
        %2462 = vmatpush.msra.mxu0 0.0
        %2463 = vmatpush.msra.mxu0 0.0
        %2464 = vmatpush.msra.mxu0 0.0
        %2465 = vmatpush.msra.mxu0 0.0
        %2466 = vmatpush.msra.mxu0 0.0
        %2467 = vmatpush.msra.mxu0 0.0
        %2468 = vmatpush.msra.mxu0 0.0
        %2469 = vmatpush.msra.mxu0 0.0
        %2470 = vmatpush.msra.mxu0 0.0
        %2471 = vmatpush.msra.mxu0 0.0
        %2472 = vmatpush.msra.mxu0 0.0
        %2473 = vmatpush.msra.mxu0 0.0
        %2474 = vmatpush.msra.mxu0 0.0
        %2475 = vmatpush.msra.mxu0 0.0
        %2476 = vmatpush.msra.mxu0 0.0
        %v2477 = vand.u32 %v2381, 4294901760
        %2478 = vmatpush.msra.mxu0 %v2477
        %v2479 = vand.u32 %v2384, 4294901760
        %v2480 = vsub.f32 %v2384, %v2479
        %v2481 = vand.u32 %v2480, 4294901760
        %2482 = vmatmul.f32.gmra.mxu0 %v2481
        %v2483 = vpop.f32.mrf.mxu0
        %v2484 = vadd.f32 %v2460, %v2483
        %2485 = vdwg.mxu0
        %2486 = vmatpush.msra.mxu0 0.0
        %2487 = vmatpush.msra.mxu0 0.0
        %2488 = vmatpush.msra.mxu0 0.0
        %2489 = vmatpush.msra.mxu0 0.0
        %2490 = vmatpush.msra.mxu0 0.0
        %2491 = vmatpush.msra.mxu0 0.0
        %2492 = vmatpush.msra.mxu0 0.0
        %2493 = vmatpush.msra.mxu0 0.0
        %2494 = vmatpush.msra.mxu0 0.0
        %2495 = vmatpush.msra.mxu0 0.0
        %2496 = vmatpush.msra.mxu0 0.0
        %2497 = vmatpush.msra.mxu0 0.0
        %2498 = vmatpush.msra.mxu0 0.0
        %2499 = vmatpush.msra.mxu0 0.0
        %2500 = vmatpush.msra.mxu0 0.0
        %v2501 = vand.u32 %v2381, 4294901760
        %v2502 = vsub.f32 %v2381, %v2501
        %v2503 = vand.u32 %v2502, 4294901760
        %2504 = vmatpush.msra.mxu0 %v2503
        %v2505 = vand.u32 %v2384, 4294901760
        %2506 = vmatmul.f32.gmra.mxu0 %v2505
        %v2507 = vpop.f32.mrf.mxu0
        %v2508 = vadd.f32 %v2484, %v2507
        %2509 = vdwg.mxu0
        %2510 = vmatpush.msra.mxu0 0.0
        %2511 = vmatpush.msra.mxu0 0.0
        %2512 = vmatpush.msra.mxu0 0.0
        %2513 = vmatpush.msra.mxu0 0.0
        %2514 = vmatpush.msra.mxu0 0.0
        %2515 = vmatpush.msra.mxu0 0.0
        %2516 = vmatpush.msra.mxu0 0.0
        %2517 = vmatpush.msra.mxu0 0.0
        %2518 = vmatpush.msra.mxu0 0.0
        %2519 = vmatpush.msra.mxu0 0.0
        %2520 = vmatpush.msra.mxu0 0.0
        %2521 = vmatpush.msra.mxu0 0.0
        %2522 = vmatpush.msra.mxu0 0.0
        %2523 = vmatpush.msra.mxu0 0.0
        %2524 = vmatpush.msra.mxu0 0.0
        %v2525 = vand.u32 %v2381, 4294901760
        %2526 = vmatpush.msra.mxu0 %v2525
        %v2527 = vand.u32 %v2384, 4294901760
        %2528 = vmatmul.f32.gmra.mxu0 %v2527
        %v2529 = vpop.f32.mrf.mxu0
        %v2530 = vadd.f32 %v2508, %v2529
        %2531 = vdwg.mxu0
        %v2532 = vsub.f32 %v2381, %v2530
        %2533 = vst.msk [vmem:[%s293] sm:$0xff] %vm306, %v2532
        %2534 = vst.msk [vmem:[%s300] sm:$0xff] %vm306, %v2530
        %s2535 = sand.u32 %s125, 1
        %s2536 = scalar_lea.sflag [#allocation4], %s2535
        %s2537 = sand.u32 %s125, 1
        %s2538 = smul.addr %s2537, 8
        %s2539 = scalar_lea.vmem [#allocation10], %s2538
        %s2540 = sand.u32 %s151, 1
        %s2541 = scalar_lea.sflag [#allocation12], %s2540
        %s2542 = sand.u32 %s151, 1
        %s2543 = smul.addr %s2542, 8
        %s2544 = scalar_lea.vmem [#allocation11], %s2543
        // Predicated region
        $region53: #{tpu_custom_call.1} parent=35 // pred_check
          %p2545 = pneg %p135
        $region54: #{tpu_custom_call.1} parent=35 // pred_check_branch
          %2547 = sbr.rel (%p2545) target = $region56
        $region55: #{tpu_custom_call.1} parent=35 // pred_region
          %2549 = vsyncadd %s2536, 0
          %s2550 = smul.addr %s28, 8
          %s2551 = scalar_lea.hbm %s4, %s2550
          %s2553 = sshll.u32 %s2539, 4
          %s2554 = int_to_ptr.vmem [resolvable:$true] %s2553
          %s2555 = sshll.u32 %s2551, 4
          %s2556 = int_to_ptr.hbm [resolvable:$true] %s2555
          %2558 = dma.vmem_to_hbm [thread:$0]  %s2554, 128, %s2556, %s2536
        $region56: #{tpu_custom_call.1} parent=35 // pred_fallthru
          _
        // Predicated region
        $region57: #{tpu_custom_call.1} parent=35 // pred_check
          %p2559 = pneg %p161
        $region58: #{tpu_custom_call.1} parent=35 // pred_check_branch
          %2561 = sbr.rel (%p2559) target = $region60
        $region59: #{tpu_custom_call.1} parent=35 // pred_region
          %2563 = vsyncadd %s2541, 0
          %s2564 = smul.addr %s28, 8
          %s2565 = scalar_lea.hbm %s5, %s2564
          %s2567 = sshll.u32 %s2544, 4
          %s2568 = int_to_ptr.vmem [resolvable:$true] %s2567
          %s2569 = sshll.u32 %s2565, 4
          %s2570 = int_to_ptr.hbm [resolvable:$true] %s2569
          %2572 = dma.vmem_to_hbm [thread:$0]  %s2568, 128, %s2570, %s2541
        $region60: #{tpu_custom_call.1} parent=35 // pred_fallthru
          _
      $region36: #{tpu_custom_call.1} parent=5 // pred_fallthru
        _
      %p2573 = scmp.le.s32.totalorder 2, %s23
      // Predicated region
      $region61: #{tpu_custom_call.1} parent=5 // pred_check
        %p2574 = pneg %p2573
      $region62: #{tpu_custom_call.1} parent=5 // pred_check_branch
        %2576 = sbr.rel (%p2574) target = $region64
      $region63: #{tpu_custom_call.1} parent=5 // pred_region
        %s2577 = ssub.s32 %s23, 2
        // Predicated region
        $region65: #{tpu_custom_call.1} parent=63 // pred_check
          %p2578 = pneg %p141
        $region66: #{tpu_custom_call.1} parent=63 // pred_check_branch
          %2580 = sbr.rel (%p2578) target = $region68
        $region67: #{tpu_custom_call.1} parent=63 // pred_region
          %s2581 = sand.u32 %s126, 1
          %s2582 = scalar_lea.sflag [#allocation4], %s2581
          %s2583 = sand.u32 %s126, 1
          %s2584 = smul.addr %s2583, 8
          %s2585 = scalar_lea.vmem [#allocation10], %s2584
          %2587 = dma.done %s2582, 128
        $region68: #{tpu_custom_call.1} parent=63 // pred_fallthru
          _
        // Predicated region
        $region69: #{tpu_custom_call.1} parent=63 // pred_check
          %p2588 = pneg %p167
        $region70: #{tpu_custom_call.1} parent=63 // pred_check_branch
          %2590 = sbr.rel (%p2588) target = $region72
        $region71: #{tpu_custom_call.1} parent=63 // pred_region
          %s2591 = sand.u32 %s152, 1
          %s2592 = scalar_lea.sflag [#allocation12], %s2591
          %s2593 = sand.u32 %s152, 1
          %s2594 = smul.addr %s2593, 8
          %s2595 = scalar_lea.vmem [#allocation11], %s2594
          %2597 = dma.done %s2592, 128
        $region72: #{tpu_custom_call.1} parent=63 // pred_fallthru
          _
      $region64: #{tpu_custom_call.1} parent=5 // pred_fallthru
        _
    $region6: #{tpu_custom_call.1} parent=1 // loop_footer
      %s27 = sadd.s32 1, %s23
    $region7: #{tpu_custom_call.1} parent=1 // loop_footer_branch
      %22 = sbr.rel target = $region3
    $region8: #{tpu_custom_call.1} parent=1 // loop_exit
      _
    %2598 = vsyncpa [#allocation3], 1
    %s2599 = scalar_lea.sflag [#allocation3], 1
    %2600 = vsyncpa %s2599, 1
    %2601 = vsyncpa [#allocation6], 1
    %2602 = vsyncpa [#allocation9], 1
    %2603 = vsyncpa [#allocation4], 1
    %s2604 = scalar_lea.sflag [#allocation4], 1
    %2605 = vsyncpa %s2604, 1
    %2606 = vsyncpa [#allocation12], 1
    %s2607 = scalar_lea.sflag [#allocation12], 1
    %2608 = vsyncpa %s2607, 1

</llo_original>
